<compile_context>
chip_gen: v5e
topology: v5e:2x2
jax: 0.10.0
libtpu: 0.0.40
codegen_flags: <defaults>
</compile_context>

<pallas_src>
import jax
import jax.numpy as jnp
from jax.experimental import pallas as pl
from jax.experimental.pallas import tpu as pltpu

IN_DIM = 28 * 28        # 784
HID = 200
OUT = 10
HID_PAD = 256           # lane-friendly padding of 200
OUT_PAD = 128           # lane-friendly padding of 10


def _mlp_kernel(x_ref, w1_ref, b1_ref, w2_ref, b2_ref, w3_ref, b3_ref, o_ref):
    # One batch tile per grid step.  Weights/biases have constant block
    # indices, so they are DMA'd once and stay resident in VMEM while the
    # x / out tiles pipeline.  bf16 MXU matmuls with f32 accumulation.
    # x arrives as f32 and is cast to bf16 here (VPU has huge slack under the
    # MXU/DMA-bound loop, and this avoids an extra HBM pass in the wrapper).
    x = x_ref[...].astype(jnp.bfloat16)                       # (TB, 784) bf16
    h1 = jnp.dot(x, w1_ref[...], preferred_element_type=jnp.float32) + b1_ref[...]
    h1 = jnp.maximum(h1, 0.0).astype(jnp.bfloat16)            # (TB, 256)
    h2 = jnp.dot(h1, w2_ref[...], preferred_element_type=jnp.float32) + b2_ref[...]
    h2 = jnp.maximum(h2, 0.0).astype(jnp.bfloat16)            # (TB, 256)
    out = jnp.dot(h2, w3_ref[...], preferred_element_type=jnp.float32) + b3_ref[...]
    o_ref[...] = out.astype(o_ref.dtype)                      # (TB, 128) f32


def _pick_tb(B, tb_req):
    """Batch tile size: multiple of 16, capped near B; prefer an even tile
    count when multiple tiles exist (v7x megacore balance)."""
    tb = max(16, min(int(tb_req), B))
    tb = ((tb + 15) // 16) * 16
    n = -(-B // tb)
    if n > 1 and n % 2 == 1:
        tb_alt = ((-(-B // (n + 1)) + 15) // 16) * 16
        n_alt = -(-B // tb_alt)
        if n_alt % 2 == 0:
            tb, n = tb_alt, n_alt
    return tb, n


def mlp_forward(x_nchw, params, *, tb=512):
    """x_nchw: [B, 1, 28, 28] float32.  Returns logits [B, 10] float32."""
    w1, b1, w2, b2, w3, b3 = params
    B = x_nchw.shape[0]
    # torch: x.view(x.size(0), -1) -> [B, 784].  Kept f32; the kernel casts.
    x = x_nchw.reshape(B, -1)

    tb, num_tiles = _pick_tb(B, tb)
    b_pad = num_tiles * tb
    if b_pad != B:
        x = jnp.pad(x, ((0, b_pad - B), (0, 0)))

    out = pl.pallas_call(
        _mlp_kernel,
        out_shape=jax.ShapeDtypeStruct((b_pad, OUT_PAD), jnp.float32),
        grid=(num_tiles,),
        in_specs=[
            pl.BlockSpec((tb, IN_DIM), lambda i: (i, 0)),        # x tile streams (f32)
            pl.BlockSpec((IN_DIM, HID_PAD), lambda i: (0, 0)),   # W1 resident
            pl.BlockSpec((1, HID_PAD), lambda i: (0, 0)),        # b1 resident
            pl.BlockSpec((HID_PAD, HID_PAD), lambda i: (0, 0)),  # W2 resident
            pl.BlockSpec((1, HID_PAD), lambda i: (0, 0)),        # b2 resident
            pl.BlockSpec((HID_PAD, OUT_PAD), lambda i: (0, 0)),  # W3 resident
            pl.BlockSpec((1, OUT_PAD), lambda i: (0, 0)),        # b3 resident
        ],
        out_specs=pl.BlockSpec((tb, OUT_PAD), lambda i: (i, 0)),
        compiler_params=pltpu.CompilerParams(
            # Batch tiles are independent -> shard across both TCs on v7x.
            dimension_semantics=("parallel",),
            # Large batch tiles (f32 input, double-buffered) can exceed v5e's
            # 16 MiB scoped default; 64 MiB fits all generations' physical VMEM.
            vmem_limit_bytes=64 * 1024 * 1024,
        ),
    )(x, w1, b1, w2, b2, w3, b3)

    # Strip batch padding and the lane padding of the logits.
    return out[:B, :OUT]


def init_params(key):
    """Deterministic synthetic parameters matching the module's shapes.

    Kaiming-uniform-ish bounds like nn.Linear's default init.  Weights are
    stored [in, out] in bf16, zero-padded to lane-friendly sizes
    (784x256, 256x256, 256x128); biases are f32, zero-padded to match.
    Zero padding is semantically inert: padded hidden units get bias 0 and
    ReLU(0) = 0, padded weight rows multiply zeros, padded logit columns are
    sliced off in the wrapper.
    """
    true_dims = [(IN_DIM, HID), (HID, HID), (HID, OUT)]
    pad_dims = [(IN_DIM, HID_PAD), (HID_PAD, HID_PAD), (HID_PAD, OUT_PAD)]
    params = []
    for (fan_in, fan_out), (pin, pout) in zip(true_dims, pad_dims):
        key, kw, kb = jax.random.split(key, 3)
        bound = 1.0 / jnp.sqrt(fan_in)
        w = jax.random.uniform(kw, (fan_in, fan_out), jnp.float32, -bound, bound)
        b = jax.random.uniform(kb, (1, fan_out), jnp.float32, -bound, bound)
        w_p = jnp.zeros((pin, pout), jnp.float32).at[:fan_in, :fan_out].set(w)
        b_p = jnp.zeros((1, pout), jnp.float32).at[:, :fan_out].set(b)
        params += [w_p.astype(jnp.bfloat16), b_p]
    return tuple(params)


def reference_forward(x_nchw, params):
    """Plain-JAX reference with the same numerics (bf16 matmuls, f32 accum)."""
    w1, b1, w2, b2, w3, b3 = params
    x = x_nchw.reshape(x_nchw.shape[0], -1).astype(jnp.bfloat16)
    h1 = jnp.maximum(
        jnp.dot(x, w1, preferred_element_type=jnp.float32) + b1, 0.0
    ).astype(jnp.bfloat16)
    h2 = jnp.maximum(
        jnp.dot(h1, w2, preferred_element_type=jnp.float32) + b2, 0.0
    ).astype(jnp.bfloat16)
    out = jnp.dot(h2, w3, preferred_element_type=jnp.float32) + b3
    return out[:, :OUT]


if __name__ == "__main__":
    key = jax.random.PRNGKey(0)
    key, kx = jax.random.split(key)

    B = 128
    x = jax.random.normal(kx, (B, 1, 28, 28), jnp.float32)  # NCHW like PyTorch

    params = init_params(key)
    ref = reference_forward(x, params)

    # Default tile (clamps to B here -> single resident-weight step).
    out = jax.block_until_ready(mlp_forward(x, params))
    # Small explicit tile -> 4-step batch pipeline (streams x/out tiles).
    out_tiled = jax.block_until_ready(mlp_forward(x, params, tb=32))

    assert out.shape == (B, OUT)
    assert out_tiled.shape == (B, OUT)
    assert jnp.allclose(out, ref, atol=1e-2, rtol=1e-2), float(
        jnp.max(jnp.abs(out - ref))
    )
    assert jnp.allclose(out_tiled, ref, atol=1e-2, rtol=1e-2), float(
        jnp.max(jnp.abs(out_tiled - ref))
    )

    print("KERNEL_OK")
</pallas_src>

<mosaic_0001>
module attributes {stable_mosaic.version = 11 : i64} {
  func.func @_mlp_kernel(%arg0: i32, %arg1: memref<128x784xf32, #tpu.memory_space<vmem>>, %arg2: memref<784x256xbf16, #tpu.memory_space<vmem>>, %arg3: memref<1x256xf32, #tpu.memory_space<vmem>>, %arg4: memref<256x256xbf16, #tpu.memory_space<vmem>>, %arg5: memref<1x256xf32, #tpu.memory_space<vmem>>, %arg6: memref<256x128xbf16, #tpu.memory_space<vmem>>, %arg7: memref<1x128xf32, #tpu.memory_space<vmem>>, %arg8: memref<128x128xf32, #tpu.memory_space<vmem>>) attributes {dimension_semantics = [#tpu.dimension_semantics<parallel>], iteration_bounds = array<i64: 1>, scalar_prefetch = 0 : i64, scratch_operands = 0 : i64, tpu.core_type = #tpu.core_type<tc>, window_params = [{transform_indices = @transform_0, window_bounds = array<i64: 128, 784>}, {pipeline_mode = #tpu.pipeline_mode<synchronous>, transform_indices = @transform_1, window_bounds = array<i64: 784, 256>}, {pipeline_mode = #tpu.pipeline_mode<synchronous>, transform_indices = @transform_2, window_bounds = array<i64: 1, 256>}, {pipeline_mode = #tpu.pipeline_mode<synchronous>, transform_indices = @transform_3, window_bounds = array<i64: 256, 256>}, {pipeline_mode = #tpu.pipeline_mode<synchronous>, transform_indices = @transform_4, window_bounds = array<i64: 1, 256>}, {pipeline_mode = #tpu.pipeline_mode<synchronous>, transform_indices = @transform_5, window_bounds = array<i64: 256, 128>}, {pipeline_mode = #tpu.pipeline_mode<synchronous>, transform_indices = @transform_6, window_bounds = array<i64: 1, 128>}, {transform_indices = @transform_7, window_bounds = array<i64: 128, 128>}]} {
    %c0 = arith.constant 0 : index
    %c0_0 = arith.constant 0 : index
    %0 = vector.load %arg1[%c0, %c0_0] : memref<128x784xf32, #tpu.memory_space<vmem>>, vector<128x784xf32>
    %1 = arith.truncf %0 : vector<128x784xf32> to vector<128x784xbf16>
    %c0_1 = arith.constant 0 : index
    %c0_2 = arith.constant 0 : index
    %2 = vector.load %arg2[%c0_1, %c0_2] : memref<784x256xbf16, #tpu.memory_space<vmem>>, vector<784x256xbf16>
    %cst = arith.constant dense<0.000000e+00> : vector<128x256xf32>
    %3 = tpu.matmul %1, %2, %cst {dimension_numbers = #tpu.dot_dimension_numbers<[1], [0], [0], [1], [0, 0, 1, 1], [], []>} : vector<128x784xbf16>, vector<784x256xbf16>, vector<128x256xf32> -> vector<128x256xf32>
    %c0_3 = arith.constant 0 : index
    %c0_4 = arith.constant 0 : index
    %4 = vector.load %arg3[%c0_3, %c0_4] : memref<1x256xf32, #tpu.memory_space<vmem>>, vector<1x256xf32>
    %5 = vector.broadcast %4 : vector<1x256xf32> to vector<128x256xf32>
    %6 = arith.addf %3, %5 : vector<128x256xf32>
    %cst_5 = arith.constant 0.000000e+00 : f32
    %7 = vector.broadcast %cst_5 : f32 to vector<128x256xf32>
    %8 = arith.maximumf %6, %7 : vector<128x256xf32>
    %9 = arith.truncf %8 : vector<128x256xf32> to vector<128x256xbf16>
    %c0_6 = arith.constant 0 : index
    %c0_7 = arith.constant 0 : index
    %10 = vector.load %arg4[%c0_6, %c0_7] : memref<256x256xbf16, #tpu.memory_space<vmem>>, vector<256x256xbf16>
    %cst_8 = arith.constant dense<0.000000e+00> : vector<128x256xf32>
    %11 = tpu.matmul %9, %10, %cst_8 {dimension_numbers = #tpu.dot_dimension_numbers<[1], [0], [0], [1], [0, 0, 1, 1], [], []>} : vector<128x256xbf16>, vector<256x256xbf16>, vector<128x256xf32> -> vector<128x256xf32>
    %c0_9 = arith.constant 0 : index
    %c0_10 = arith.constant 0 : index
    %12 = vector.load %arg5[%c0_9, %c0_10] : memref<1x256xf32, #tpu.memory_space<vmem>>, vector<1x256xf32>
    %13 = vector.broadcast %12 : vector<1x256xf32> to vector<128x256xf32>
    %14 = arith.addf %11, %13 : vector<128x256xf32>
    %cst_11 = arith.constant 0.000000e+00 : f32
    %15 = vector.broadcast %cst_11 : f32 to vector<128x256xf32>
    %16 = arith.maximumf %14, %15 : vector<128x256xf32>
    %17 = arith.truncf %16 : vector<128x256xf32> to vector<128x256xbf16>
    %c0_12 = arith.constant 0 : index
    %c0_13 = arith.constant 0 : index
    %18 = vector.load %arg6[%c0_12, %c0_13] : memref<256x128xbf16, #tpu.memory_space<vmem>>, vector<256x128xbf16>
    %cst_14 = arith.constant dense<0.000000e+00> : vector<128x128xf32>
    %19 = tpu.matmul %17, %18, %cst_14 {dimension_numbers = #tpu.dot_dimension_numbers<[1], [0], [0], [1], [0, 0, 1, 1], [], []>} : vector<128x256xbf16>, vector<256x128xbf16>, vector<128x128xf32> -> vector<128x128xf32>
    %c0_15 = arith.constant 0 : index
    %c0_16 = arith.constant 0 : index
    %20 = vector.load %arg7[%c0_15, %c0_16] : memref<1x128xf32, #tpu.memory_space<vmem>>, vector<1x128xf32>
    %21 = vector.broadcast %20 : vector<1x128xf32> to vector<128x128xf32>
    %22 = arith.addf %19, %21 : vector<128x128xf32>
    %c0_17 = arith.constant 0 : index
    %c0_18 = arith.constant 0 : index
    %23 = vector.load %arg8[%c0_17, %c0_18] : memref<128x128xf32, #tpu.memory_space<vmem>>, vector<128x128xf32>
    tpu.vector_store %arg8[%c0_17, %c0_18], %22 {strides = array<i32>} : memref<128x128xf32, #tpu.memory_space<vmem>>, vector<128x128xf32>,
    return
  }
  func.func @transform_0(%arg0: i32) -> (i32, i32) {
    %c0_i32 = arith.constant 0 : i32
    %c0_i32_0 = arith.constant 0 : i32
    return %arg0, %c0_i32 : i32, i32
  }
  func.func @transform_1(%arg0: i32) -> (i32, i32) {
    %c0_i32 = arith.constant 0 : i32
    %c0_i32_0 = arith.constant 0 : i32
    %c0_i32_1 = arith.constant 0 : i32
    return %c0_i32, %c0_i32_0 : i32, i32
  }
  func.func @transform_2(%arg0: i32) -> (i32, i32) {
    %c0_i32 = arith.constant 0 : i32
    %c0_i32_0 = arith.constant 0 : i32
    %c0_i32_1 = arith.constant 0 : i32
    return %c0_i32, %c0_i32_0 : i32, i32
  }
  func.func @transform_3(%arg0: i32) -> (i32, i32) {
    %c0_i32 = arith.constant 0 : i32
    %c0_i32_0 = arith.constant 0 : i32
    %c0_i32_1 = arith.constant 0 : i32
    return %c0_i32, %c0_i32_0 : i32, i32
  }
  func.func @transform_4(%arg0: i32) -> (i32, i32) {
    %c0_i32 = arith.constant 0 : i32
    %c0_i32_0 = arith.constant 0 : i32
    %c0_i32_1 = arith.constant 0 : i32
    return %c0_i32, %c0_i32_0 : i32, i32
  }
  func.func @transform_5(%arg0: i32) -> (i32, i32) {
    %c0_i32 = arith.constant 0 : i32
    %c0_i32_0 = arith.constant 0 : i32
    %c0_i32_1 = arith.constant 0 : i32
    return %c0_i32, %c0_i32_0 : i32, i32
  }
  func.func @transform_6(%arg0: i32) -> (i32, i32) {
    %c0_i32 = arith.constant 0 : i32
    %c0_i32_0 = arith.constant 0 : i32
    %c0_i32_1 = arith.constant 0 : i32
    return %c0_i32, %c0_i32_0 : i32, i32
  }
  func.func @transform_7(%arg0: i32) -> (i32, i32) {
    %c0_i32 = arith.constant 0 : i32
    %c0_i32_0 = arith.constant 0 : i32
    return %arg0, %c0_i32 : i32, i32
  }
}

</mosaic_0001>

<llo_original>
// kernel: tpu_custom_call.1
$region0: #{tpu_custom_call.1}
  #allocation0 [shape = 'u32[]', space=smem, size = 0x4, offset = 0x4, fixed_abs, tag = 'smem constant byte address 0x4 - core index']
  #allocation1 [shape = 'u32[72,128]{1,0:T(1,128)}', space=vmem, size = 0x9000, scoped, tag = 'internal scratch']
  %s0 = inlined_call_operand.vmem [shape: f32[128,784], index: 0, kind: input, shape index: {}]
  %s1 = inlined_call_operand.vmem [shape: bf16[784,256], index: 1, kind: input, shape index: {}]
  %s2 = inlined_call_operand.vmem [shape: f32[1,256], index: 2, kind: input, shape index: {}]
  %s3 = inlined_call_operand.vmem [shape: bf16[256,256], index: 3, kind: input, shape index: {}]
  %s4 = inlined_call_operand.vmem [shape: f32[1,256], index: 4, kind: input, shape index: {}]
  %s5 = inlined_call_operand.vmem [shape: bf16[256,128], index: 5, kind: input, shape index: {}]
  %s6 = inlined_call_operand.vmem [shape: f32[1,128], index: 6, kind: input, shape index: {}]
  %s7 = inlined_call_operand.hbm [shape: f32[128,128], index: 7, kind: output, shape index: {}]
  %s8 = sld [smem:[#allocation0]]
  $region38: #{tpu_custom_call.1} parent=0
    _
  %s10 = ssub.s32 1, %s8
  %s11 = scalar_select 0, %s10, %s8
  $region1: #{tpu_custom_call.1} parent=0
    #allocation2 [shape = 'u8[65536]{0}', space=vmem, size = 0x10000, scoped, tag = 'output window, operand 0, single buffered']
    #allocation3 [shape = 's32[1]{0}', space=sflag, size = 0x4, scoped, tag = 'scoped memory for tpu_custom_call.1']
    %12 = vsyncpa [#allocation3], 0
    // Predicated region
    $region2: #{tpu_custom_call.1} parent=1 // pred_check
      _
    $region3: #{tpu_custom_call.1} parent=1 // pred_check_branch
      %14 = sbr.rel (0) target = $region5
    $region4: #{tpu_custom_call.1} parent=1 // pred_region
      _
    $region5: #{tpu_custom_call.1} parent=1 // pred_fallthru
      _
    // Predicated region
    $region6: #{tpu_custom_call.1} parent=1 // pred_check
      _
    $region7: #{tpu_custom_call.1} parent=1 // pred_check_branch
      %16 = sbr.rel (0) target = $region9
    $region8: #{tpu_custom_call.1} parent=1 // pred_region
      _
    $region9: #{tpu_custom_call.1} parent=1 // pred_fallthru
      _
    // Predicated region
    $region10: #{tpu_custom_call.1} parent=1 // pred_check
      _
    $region11: #{tpu_custom_call.1} parent=1 // pred_check_branch
      %18 = sbr.rel (0) target = $region13
    $region12: #{tpu_custom_call.1} parent=1 // pred_region
      _
    $region13: #{tpu_custom_call.1} parent=1 // pred_fallthru
      _
    // Predicated region
    $region14: #{tpu_custom_call.1} parent=1 // pred_check
      _
    $region15: #{tpu_custom_call.1} parent=1 // pred_check_branch
      %20 = sbr.rel (0) target = $region17
    $region16: #{tpu_custom_call.1} parent=1 // pred_region
      _
    $region17: #{tpu_custom_call.1} parent=1 // pred_fallthru
      _
    // Predicated region
    $region18: #{tpu_custom_call.1} parent=1 // pred_check
      _
    $region19: #{tpu_custom_call.1} parent=1 // pred_check_branch
      %22 = sbr.rel (0) target = $region21
    $region20: #{tpu_custom_call.1} parent=1 // pred_region
      _
    $region21: #{tpu_custom_call.1} parent=1 // pred_fallthru
      _
    // Predicated region
    $region22: #{tpu_custom_call.1} parent=1 // pred_check
      _
    $region23: #{tpu_custom_call.1} parent=1 // pred_check_branch
      %24 = sbr.rel (0) target = $region25
    $region24: #{tpu_custom_call.1} parent=1 // pred_region
      _
    $region25: #{tpu_custom_call.1} parent=1 // pred_fallthru
      _
    // Predicated region
    $region26: #{tpu_custom_call.1} parent=1 // pred_check
      _
    $region27: #{tpu_custom_call.1} parent=1 // pred_check_branch
      %26 = sbr.rel (0) target = $region29
    $region28: #{tpu_custom_call.1} parent=1 // pred_region
      _
    $region29: #{tpu_custom_call.1} parent=1 // pred_fallthru
      _
    %v28 = vld [vmem:[%s0] sm:$0xff]
    %v29 = vld [vmem:[%s0 + $0x8] sm:$0xff]
    %v30 = vld [vmem:[%s0 + $0x10] sm:$0xff]
    %v31 = vld [vmem:[%s0 + $0x18] sm:$0xff]
    %v32 = vld [vmem:[%s0 + $0x20] sm:$0xff]
    %v33 = vld [vmem:[%s0 + $0x28] sm:$0xff]
    %v34 = vld [vmem:[%s0 + $0x30] sm:$0xff]
    %v35 = vld [vmem:[%s0 + $0x38] sm:$0xff]
    %v36 = vld [vmem:[%s0 + $0x40] sm:$0xff]
    %v37 = vld [vmem:[%s0 + $0x48] sm:$0xff]
    %v38 = vld [vmem:[%s0 + $0x50] sm:$0xff]
    %v39 = vld [vmem:[%s0 + $0x58] sm:$0xff]
    %v40 = vld [vmem:[%s0 + $0x60] sm:$0xff]
    %v41 = vld [vmem:[%s0 + $0x68] sm:$0xff]
    %v42 = vld [vmem:[%s0 + $0x70] sm:$0xff]
    %v43 = vld [vmem:[%s0 + $0x78] sm:$0xff]
    %v44 = vld [vmem:[%s0 + $0x80] sm:$0xff]
    %v45 = vld [vmem:[%s0 + $0x88] sm:$0xff]
    %v46 = vld [vmem:[%s0 + $0x90] sm:$0xff]
    %v47 = vld [vmem:[%s0 + $0x98] sm:$0xff]
    %v48 = vld [vmem:[%s0 + $0xa0] sm:$0xff]
    %v49 = vld [vmem:[%s0 + $0xa8] sm:$0xff]
    %v50 = vld [vmem:[%s0 + $0xb0] sm:$0xff]
    %v51 = vld [vmem:[%s0 + $0xb8] sm:$0xff]
    %v52 = vld [vmem:[%s0 + $0xc0] sm:$0xff]
    %v53 = vld [vmem:[%s0 + $0xc8] sm:$0xff]
    %v54 = vld [vmem:[%s0 + $0xd0] sm:$0xff]
    %v55 = vld [vmem:[%s0 + $0xd8] sm:$0xff]
    %v56 = vld [vmem:[%s0 + $0xe0] sm:$0xff]
    %v57 = vld [vmem:[%s0 + $0xe8] sm:$0xff]
    %v58 = vld [vmem:[%s0 + $0xf0] sm:$0xff]
    %v59 = vld [vmem:[%s0 + $0xf8] sm:$0xff]
    %v60 = vld [vmem:[%s0 + $0x100] sm:$0xff]
    %v61 = vld [vmem:[%s0 + $0x108] sm:$0xff]
    %v62 = vld [vmem:[%s0 + $0x110] sm:$0xff]
    %v63 = vld [vmem:[%s0 + $0x118] sm:$0xff]
    %v64 = vld [vmem:[%s0 + $0x120] sm:$0xff]
    %v65 = vld [vmem:[%s0 + $0x128] sm:$0xff]
    %v66 = vld [vmem:[%s0 + $0x130] sm:$0xff]
    %v67 = vld [vmem:[%s0 + $0x138] sm:$0xff]
    %v68 = vld [vmem:[%s0 + $0x140] sm:$0xff]
    %v69 = vld [vmem:[%s0 + $0x148] sm:$0xff]
    %v70 = vld [vmem:[%s0 + $0x150] sm:$0xff]
    %v71 = vld [vmem:[%s0 + $0x158] sm:$0xff]
    %v72 = vld [vmem:[%s0 + $0x160] sm:$0xff]
    %v73 = vld [vmem:[%s0 + $0x168] sm:$0xff]
    %v74 = vld [vmem:[%s0 + $0x170] sm:$0xff]
    %v75 = vld [vmem:[%s0 + $0x178] sm:$0xff]
    %v76 = vld [vmem:[%s0 + $0x180] sm:$0xff]
    %v77 = vld [vmem:[%s0 + $0x188] sm:$0xff]
    %v78 = vld [vmem:[%s0 + $0x190] sm:$0xff]
    %v79 = vld [vmem:[%s0 + $0x198] sm:$0xff]
    %v80 = vld [vmem:[%s0 + $0x1a0] sm:$0xff]
    %v81 = vld [vmem:[%s0 + $0x1a8] sm:$0xff]
    %v82 = vld [vmem:[%s0 + $0x1b0] sm:$0xff]
    %v83 = vld [vmem:[%s0 + $0x1b8] sm:$0xff]
    %v84 = vld [vmem:[%s0 + $0x1c0] sm:$0xff]
    %v85 = vld [vmem:[%s0 + $0x1c8] sm:$0xff]
    %v86 = vld [vmem:[%s0 + $0x1d0] sm:$0xff]
    %v87 = vld [vmem:[%s0 + $0x1d8] sm:$0xff]
    %v88 = vld [vmem:[%s0 + $0x1e0] sm:$0xff]
    %v89 = vld [vmem:[%s0 + $0x1e8] sm:$0xff]
    %v90 = vld [vmem:[%s0 + $0x1f0] sm:$0xff]
    %v91 = vld [vmem:[%s0 + $0x1f8] sm:$0xff]
    %v92 = vld [vmem:[%s0 + $0x200] sm:$0xff]
    %v93 = vld [vmem:[%s0 + $0x208] sm:$0xff]
    %v94 = vld [vmem:[%s0 + $0x210] sm:$0xff]
    %v95 = vld [vmem:[%s0 + $0x218] sm:$0xff]
    %v96 = vld [vmem:[%s0 + $0x220] sm:$0xff]
    %v97 = vld [vmem:[%s0 + $0x228] sm:$0xff]
    %v98 = vld [vmem:[%s0 + $0x230] sm:$0xff]
    %v99 = vld [vmem:[%s0 + $0x238] sm:$0xff]
    %v100 = vld [vmem:[%s0 + $0x240] sm:$0xff]
    %v101 = vld [vmem:[%s0 + $0x248] sm:$0xff]
    %v102 = vld [vmem:[%s0 + $0x250] sm:$0xff]
    %v103 = vld [vmem:[%s0 + $0x258] sm:$0xff]
    %v104 = vld [vmem:[%s0 + $0x260] sm:$0xff]
    %v105 = vld [vmem:[%s0 + $0x268] sm:$0xff]
    %v106 = vld [vmem:[%s0 + $0x270] sm:$0xff]
    %v107 = vld [vmem:[%s0 + $0x278] sm:$0xff]
    %v108 = vld [vmem:[%s0 + $0x280] sm:$0xff]
    %v109 = vld [vmem:[%s0 + $0x288] sm:$0xff]
    %v110 = vld [vmem:[%s0 + $0x290] sm:$0xff]
    %v111 = vld [vmem:[%s0 + $0x298] sm:$0xff]
    %v112 = vld [vmem:[%s0 + $0x2a0] sm:$0xff]
    %v113 = vld [vmem:[%s0 + $0x2a8] sm:$0xff]
    %v114 = vld [vmem:[%s0 + $0x2b0] sm:$0xff]
    %v115 = vld [vmem:[%s0 + $0x2b8] sm:$0xff]
    %v116 = vld [vmem:[%s0 + $0x2c0] sm:$0xff]
    %v117 = vld [vmem:[%s0 + $0x2c8] sm:$0xff]
    %v118 = vld [vmem:[%s0 + $0x2d0] sm:$0xff]
    %v119 = vld [vmem:[%s0 + $0x2d8] sm:$0xff]
    %v120 = vld [vmem:[%s0 + $0x2e0] sm:$0xff]
    %v121 = vld [vmem:[%s0 + $0x2e8] sm:$0xff]
    %v122 = vld [vmem:[%s0 + $0x2f0] sm:$0xff]
    %v123 = vld [vmem:[%s0 + $0x2f8] sm:$0xff]
    %v124 = vld [vmem:[%s0 + $0x300] sm:$0xff]
    %v125 = vld [vmem:[%s0 + $0x308] sm:$0xff]
    %v126 = vld [vmem:[%s0 + $0x310] sm:$0xff]
    %v127 = vld [vmem:[%s0 + $0x318] sm:$0xff]
    %v128 = vld [vmem:[%s0 + $0x320] sm:$0xff]
    %v129 = vld [vmem:[%s0 + $0x328] sm:$0xff]
    %v130 = vld [vmem:[%s0 + $0x330] sm:$0xff]
    %v131 = vld [vmem:[%s0 + $0x338] sm:$0xff]
    %v132 = vld [vmem:[%s0 + $0x340] sm:$0xff]
    %v133 = vld [vmem:[%s0 + $0x348] sm:$0xff]
    %v134 = vld [vmem:[%s0 + $0x350] sm:$0xff]
    %v135 = vld [vmem:[%s0 + $0x358] sm:$0xff]
    %v136 = vld [vmem:[%s0 + $0x360] sm:$0xff]
    %v137 = vld [vmem:[%s0 + $0x368] sm:$0xff]
    %v138 = vld [vmem:[%s0 + $0x370] sm:$0xff]
    %v139 = vld [vmem:[%s0 + $0x378] sm:$0xff]
    %v140 = vpack.c.bf16 %v35, %v28
    %v141 = vpack.c.bf16 %v36, %v29
    %v142 = vpack.c.bf16 %v37, %v30
    %v143 = vpack.c.bf16 %v38, %v31
    %v144 = vpack.c.bf16 %v39, %v32
    %v145 = vpack.c.bf16 %v40, %v33
    %v146 = vpack.c.bf16 %v41, %v34
    %v147 = vpack.c.bf16 %v49, %v42
    %v148 = vpack.c.bf16 %v50, %v43
    %v149 = vpack.c.bf16 %v51, %v44
    %v150 = vpack.c.bf16 %v52, %v45
    %v151 = vpack.c.bf16 %v53, %v46
    %v152 = vpack.c.bf16 %v54, %v47
    %v153 = vpack.c.bf16 %v55, %v48
    %v154 = vpack.c.bf16 %v63, %v56
    %v155 = vpack.c.bf16 %v64, %v57
    %v156 = vpack.c.bf16 %v65, %v58
    %v157 = vpack.c.bf16 %v66, %v59
    %v158 = vpack.c.bf16 %v67, %v60
    %v159 = vpack.c.bf16 %v68, %v61
    %v160 = vpack.c.bf16 %v69, %v62
    %v161 = vpack.c.bf16 %v77, %v70
    %v162 = vpack.c.bf16 %v78, %v71
    %v163 = vpack.c.bf16 %v79, %v72
    %v164 = vpack.c.bf16 %v80, %v73
    %v165 = vpack.c.bf16 %v81, %v74
    %v166 = vpack.c.bf16 %v82, %v75
    %v167 = vpack.c.bf16 %v83, %v76
    %v168 = vpack.c.bf16 %v91, %v84
    %v169 = vpack.c.bf16 %v92, %v85
    %v170 = vpack.c.bf16 %v93, %v86
    %v171 = vpack.c.bf16 %v94, %v87
    %v172 = vpack.c.bf16 %v95, %v88
    %v173 = vpack.c.bf16 %v96, %v89
    %v174 = vpack.c.bf16 %v97, %v90
    %v175 = vpack.c.bf16 %v105, %v98
    %v176 = vpack.c.bf16 %v106, %v99
    %v177 = vpack.c.bf16 %v107, %v100
    %v178 = vpack.c.bf16 %v108, %v101
    %v179 = vpack.c.bf16 %v109, %v102
    %v180 = vpack.c.bf16 %v110, %v103
    %v181 = vpack.c.bf16 %v111, %v104
    %v182 = vpack.c.bf16 %v119, %v112
    %v183 = vpack.c.bf16 %v120, %v113
    %v184 = vpack.c.bf16 %v121, %v114
    %v185 = vpack.c.bf16 %v122, %v115
    %v186 = vpack.c.bf16 %v123, %v116
    %v187 = vpack.c.bf16 %v124, %v117
    %v188 = vpack.c.bf16 %v125, %v118
    %v189 = vpack.c.bf16 %v133, %v126
    %v190 = vpack.c.bf16 %v134, %v127
    %v191 = vpack.c.bf16 %v135, %v128
    %v192 = vpack.c.bf16 %v136, %v129
    %v193 = vpack.c.bf16 %v137, %v130
    %v194 = vpack.c.bf16 %v138, %v131
    %v195 = vpack.c.bf16 %v139, %v132
    %v196 = vld [vmem:[%s1] sm:$0xff]
    %v197 = vld [vmem:[%s1 + $0x8] sm:$0xff]
    %v198 = vld [vmem:[%s1 + $0x10] sm:$0xff]
    %v199 = vld [vmem:[%s1 + $0x18] sm:$0xff]
    %v200 = vld [vmem:[%s1 + $0x20] sm:$0xff]
    %v201 = vld [vmem:[%s1 + $0x28] sm:$0xff]
    %v202 = vld [vmem:[%s1 + $0x30] sm:$0xff]
    %v203 = vld [vmem:[%s1 + $0x38] sm:$0xff]
    %v204 = vld [vmem:[%s1 + $0x40] sm:$0xff]
    %v205 = vld [vmem:[%s1 + $0x48] sm:$0xff]
    %v206 = vld [vmem:[%s1 + $0x50] sm:$0xff]
    %v207 = vld [vmem:[%s1 + $0x58] sm:$0xff]
    %v208 = vld [vmem:[%s1 + $0x60] sm:$0xff]
    %v209 = vld [vmem:[%s1 + $0x68] sm:$0xff]
    %v210 = vld [vmem:[%s1 + $0x70] sm:$0xff]
    %v211 = vld [vmem:[%s1 + $0x78] sm:$0xff]
    %v212 = vld [vmem:[%s1 + $0x80] sm:$0xff]
    %v213 = vld [vmem:[%s1 + $0x88] sm:$0xff]
    %v214 = vld [vmem:[%s1 + $0x90] sm:$0xff]
    %v215 = vld [vmem:[%s1 + $0x98] sm:$0xff]
    %v216 = vld [vmem:[%s1 + $0xa0] sm:$0xff]
    %v217 = vld [vmem:[%s1 + $0xa8] sm:$0xff]
    %v218 = vld [vmem:[%s1 + $0xb0] sm:$0xff]
    %v219 = vld [vmem:[%s1 + $0xb8] sm:$0xff]
    %v220 = vld [vmem:[%s1 + $0xc0] sm:$0xff]
    %v221 = vld [vmem:[%s1 + $0xc8] sm:$0xff]
    %v222 = vld [vmem:[%s1 + $0xd0] sm:$0xff]
    %v223 = vld [vmem:[%s1 + $0xd8] sm:$0xff]
    %v224 = vld [vmem:[%s1 + $0xe0] sm:$0xff]
    %v225 = vld [vmem:[%s1 + $0xe8] sm:$0xff]
    %v226 = vld [vmem:[%s1 + $0xf0] sm:$0xff]
    %v227 = vld [vmem:[%s1 + $0xf8] sm:$0xff]
    %v228 = vld [vmem:[%s1 + $0x100] sm:$0xff]
    %v229 = vld [vmem:[%s1 + $0x108] sm:$0xff]
    %v230 = vld [vmem:[%s1 + $0x110] sm:$0xff]
    %v231 = vld [vmem:[%s1 + $0x118] sm:$0xff]
    %v232 = vld [vmem:[%s1 + $0x120] sm:$0xff]
    %v233 = vld [vmem:[%s1 + $0x128] sm:$0xff]
    %v234 = vld [vmem:[%s1 + $0x130] sm:$0xff]
    %v235 = vld [vmem:[%s1 + $0x138] sm:$0xff]
    %v236 = vld [vmem:[%s1 + $0x140] sm:$0xff]
    %v237 = vld [vmem:[%s1 + $0x148] sm:$0xff]
    %v238 = vld [vmem:[%s1 + $0x150] sm:$0xff]
    %v239 = vld [vmem:[%s1 + $0x158] sm:$0xff]
    %v240 = vld [vmem:[%s1 + $0x160] sm:$0xff]
    %v241 = vld [vmem:[%s1 + $0x168] sm:$0xff]
    %v242 = vld [vmem:[%s1 + $0x170] sm:$0xff]
    %v243 = vld [vmem:[%s1 + $0x178] sm:$0xff]
    %v244 = vld [vmem:[%s1 + $0x180] sm:$0xff]
    %v245 = vld [vmem:[%s1 + $0x188] sm:$0xff]
    %v246 = vld [vmem:[%s1 + $0x190] sm:$0xff]
    %v247 = vld [vmem:[%s1 + $0x198] sm:$0xff]
    %v248 = vld [vmem:[%s1 + $0x1a0] sm:$0xff]
    %v249 = vld [vmem:[%s1 + $0x1a8] sm:$0xff]
    %v250 = vld [vmem:[%s1 + $0x1b0] sm:$0xff]
    %v251 = vld [vmem:[%s1 + $0x1b8] sm:$0xff]
    %v252 = vld [vmem:[%s1 + $0x1c0] sm:$0xff]
    %v253 = vld [vmem:[%s1 + $0x1c8] sm:$0xff]
    %v254 = vld [vmem:[%s1 + $0x1d0] sm:$0xff]
    %v255 = vld [vmem:[%s1 + $0x1d8] sm:$0xff]
    %v256 = vld [vmem:[%s1 + $0x1e0] sm:$0xff]
    %v257 = vld [vmem:[%s1 + $0x1e8] sm:$0xff]
    %v258 = vld [vmem:[%s1 + $0x1f0] sm:$0xff]
    %v259 = vld [vmem:[%s1 + $0x1f8] sm:$0xff]
    %v260 = vld [vmem:[%s1 + $0x200] sm:$0xff]
    %v261 = vld [vmem:[%s1 + $0x208] sm:$0xff]
    %v262 = vld [vmem:[%s1 + $0x210] sm:$0xff]
    %v263 = vld [vmem:[%s1 + $0x218] sm:$0xff]
    %v264 = vld [vmem:[%s1 + $0x220] sm:$0xff]
    %v265 = vld [vmem:[%s1 + $0x228] sm:$0xff]
    %v266 = vld [vmem:[%s1 + $0x230] sm:$0xff]
    %v267 = vld [vmem:[%s1 + $0x238] sm:$0xff]
    %v268 = vld [vmem:[%s1 + $0x240] sm:$0xff]
    %v269 = vld [vmem:[%s1 + $0x248] sm:$0xff]
    %v270 = vld [vmem:[%s1 + $0x250] sm:$0xff]
    %v271 = vld [vmem:[%s1 + $0x258] sm:$0xff]
    %v272 = vld [vmem:[%s1 + $0x260] sm:$0xff]
    %v273 = vld [vmem:[%s1 + $0x268] sm:$0xff]
    %v274 = vld [vmem:[%s1 + $0x270] sm:$0xff]
    %v275 = vld [vmem:[%s1 + $0x278] sm:$0xff]
    %v276 = vld [vmem:[%s1 + $0x280] sm:$0xff]
    %v277 = vld [vmem:[%s1 + $0x288] sm:$0xff]
    %v278 = vld [vmem:[%s1 + $0x290] sm:$0xff]
    %v279 = vld [vmem:[%s1 + $0x298] sm:$0xff]
    %v280 = vld [vmem:[%s1 + $0x2a0] sm:$0xff]
    %v281 = vld [vmem:[%s1 + $0x2a8] sm:$0xff]
    %v282 = vld [vmem:[%s1 + $0x2b0] sm:$0xff]
    %v283 = vld [vmem:[%s1 + $0x2b8] sm:$0xff]
    %v284 = vld [vmem:[%s1 + $0x2c0] sm:$0xff]
    %v285 = vld [vmem:[%s1 + $0x2c8] sm:$0xff]
    %v286 = vld [vmem:[%s1 + $0x2d0] sm:$0xff]
    %v287 = vld [vmem:[%s1 + $0x2d8] sm:$0xff]
    %v288 = vld [vmem:[%s1 + $0x2e0] sm:$0xff]
    %v289 = vld [vmem:[%s1 + $0x2e8] sm:$0xff]
    %v290 = vld [vmem:[%s1 + $0x2f0] sm:$0xff]
    %v291 = vld [vmem:[%s1 + $0x2f8] sm:$0xff]
    %v292 = vld [vmem:[%s1 + $0x300] sm:$0xff]
    %v293 = vld [vmem:[%s1 + $0x308] sm:$0xff]
    %v294 = vld [vmem:[%s2] sm:$0x3]
    %v296 = vperm.slane %v294, 0
    %v297 = vperm.slane %v294, 1
    %v398 = vunpack.c.l.b16 %v196
    %v399 = vunpack.c.h.b16 %v196
    %v400 = vunpack.c.l.b16 %v197
    %v401 = vunpack.c.h.b16 %v197
    %v402 = vunpack.c.l.b16 %v198
    %v403 = vunpack.c.h.b16 %v198
    %v404 = vunpack.c.l.b16 %v199
    %v405 = vunpack.c.h.b16 %v199
    %v406 = vunpack.c.l.b16 %v200
    %v407 = vunpack.c.h.b16 %v200
    %v408 = vunpack.c.l.b16 %v201
    %v409 = vunpack.c.h.b16 %v201
    %v410 = vunpack.c.l.b16 %v202
    %v411 = vunpack.c.h.b16 %v202
    %v412 = vunpack.c.l.b16 %v203
    %v413 = vunpack.c.h.b16 %v203
    %v414 = vunpack.c.l.b16 %v204
    %v415 = vunpack.c.h.b16 %v204
    %v416 = vunpack.c.l.b16 %v205
    %v417 = vunpack.c.h.b16 %v205
    %v418 = vunpack.c.l.b16 %v206
    %v419 = vunpack.c.h.b16 %v206
    %v420 = vunpack.c.l.b16 %v207
    %v421 = vunpack.c.h.b16 %v207
    %v422 = vunpack.c.l.b16 %v208
    %v423 = vunpack.c.h.b16 %v208
    %v424 = vunpack.c.l.b16 %v209
    %v425 = vunpack.c.h.b16 %v209
    %v426 = vunpack.c.l.b16 %v210
    %v427 = vunpack.c.h.b16 %v210
    %v428 = vunpack.c.l.b16 %v211
    %v429 = vunpack.c.h.b16 %v211
    %v430 = vunpack.c.l.b16 %v212
    %v431 = vunpack.c.h.b16 %v212
    %v432 = vunpack.c.l.b16 %v213
    %v433 = vunpack.c.h.b16 %v213
    %v434 = vunpack.c.l.b16 %v214
    %v435 = vunpack.c.h.b16 %v214
    %v436 = vunpack.c.l.b16 %v215
    %v437 = vunpack.c.h.b16 %v215
    %v438 = vunpack.c.l.b16 %v216
    %v439 = vunpack.c.h.b16 %v216
    %v440 = vunpack.c.l.b16 %v217
    %v441 = vunpack.c.h.b16 %v217
    %v442 = vunpack.c.l.b16 %v218
    %v443 = vunpack.c.h.b16 %v218
    %v444 = vunpack.c.l.b16 %v219
    %v445 = vunpack.c.h.b16 %v219
    %v446 = vunpack.c.l.b16 %v220
    %v447 = vunpack.c.h.b16 %v220
    %v448 = vunpack.c.l.b16 %v221
    %v449 = vunpack.c.h.b16 %v221
    %v450 = vunpack.c.l.b16 %v222
    %v451 = vunpack.c.h.b16 %v222
    %v452 = vunpack.c.l.b16 %v223
    %v453 = vunpack.c.h.b16 %v223
    %v454 = vunpack.c.l.b16 %v224
    %v455 = vunpack.c.h.b16 %v224
    %v456 = vunpack.c.l.b16 %v225
    %v457 = vunpack.c.h.b16 %v225
    %v458 = vunpack.c.l.b16 %v226
    %v459 = vunpack.c.h.b16 %v226
    %v460 = vunpack.c.l.b16 %v227
    %v461 = vunpack.c.h.b16 %v227
    %v462 = vunpack.c.l.b16 %v228
    %v463 = vunpack.c.h.b16 %v228
    %v464 = vunpack.c.l.b16 %v229
    %v465 = vunpack.c.h.b16 %v229
    %v466 = vunpack.c.l.b16 %v230
    %v467 = vunpack.c.h.b16 %v230
    %v468 = vunpack.c.l.b16 %v231
    %v469 = vunpack.c.h.b16 %v231
    %v470 = vunpack.c.l.b16 %v232
    %v471 = vunpack.c.h.b16 %v232
    %v472 = vunpack.c.l.b16 %v233
    %v473 = vunpack.c.h.b16 %v233
    %v474 = vunpack.c.l.b16 %v234
    %v475 = vunpack.c.h.b16 %v234
    %v476 = vunpack.c.l.b16 %v235
    %v477 = vunpack.c.h.b16 %v235
    %v478 = vunpack.c.l.b16 %v236
    %v479 = vunpack.c.h.b16 %v236
    %v480 = vunpack.c.l.b16 %v237
    %v481 = vunpack.c.h.b16 %v237
    %v482 = vunpack.c.l.b16 %v238
    %v483 = vunpack.c.h.b16 %v238
    %v484 = vunpack.c.l.b16 %v239
    %v485 = vunpack.c.h.b16 %v239
    %v486 = vunpack.c.l.b16 %v240
    %v487 = vunpack.c.h.b16 %v240
    %v488 = vunpack.c.l.b16 %v241
    %v489 = vunpack.c.h.b16 %v241
    %v490 = vunpack.c.l.b16 %v242
    %v491 = vunpack.c.h.b16 %v242
    %v492 = vunpack.c.l.b16 %v243
    %v493 = vunpack.c.h.b16 %v243
    %v494 = vunpack.c.l.b16 %v244
    %v495 = vunpack.c.h.b16 %v244
    %v496 = vunpack.c.l.b16 %v245
    %v497 = vunpack.c.h.b16 %v245
    %v498 = vunpack.c.l.b16 %v246
    %v499 = vunpack.c.h.b16 %v246
    %v500 = vunpack.c.l.b16 %v247
    %v501 = vunpack.c.h.b16 %v247
    %v502 = vunpack.c.l.b16 %v248
    %v503 = vunpack.c.h.b16 %v248
    %v504 = vunpack.c.l.b16 %v249
    %v505 = vunpack.c.h.b16 %v249
    %v506 = vunpack.c.l.b16 %v250
    %v507 = vunpack.c.h.b16 %v250
    %v508 = vunpack.c.l.b16 %v251
    %v509 = vunpack.c.h.b16 %v251
    %v510 = vunpack.c.l.b16 %v252
    %v511 = vunpack.c.h.b16 %v252
    %v512 = vunpack.c.l.b16 %v253
    %v513 = vunpack.c.h.b16 %v253
    %v514 = vunpack.c.l.b16 %v254
    %v515 = vunpack.c.h.b16 %v254
    %v516 = vunpack.c.l.b16 %v255
    %v517 = vunpack.c.h.b16 %v255
    %v518 = vunpack.c.l.b16 %v256
    %v519 = vunpack.c.h.b16 %v256
    %v520 = vunpack.c.l.b16 %v257
    %v521 = vunpack.c.h.b16 %v257
    %v522 = vunpack.c.l.b16 %v258
    %v523 = vunpack.c.h.b16 %v258
    %v524 = vunpack.c.l.b16 %v259
    %v525 = vunpack.c.h.b16 %v259
    %v526 = vunpack.c.l.b16 %v260
    %v527 = vunpack.c.h.b16 %v260
    %v528 = vunpack.c.l.b16 %v261
    %v529 = vunpack.c.h.b16 %v261
    %v530 = vunpack.c.l.b16 %v262
    %v531 = vunpack.c.h.b16 %v262
    %v532 = vunpack.c.l.b16 %v263
    %v533 = vunpack.c.h.b16 %v263
    %v534 = vunpack.c.l.b16 %v264
    %v535 = vunpack.c.h.b16 %v264
    %v536 = vunpack.c.l.b16 %v265
    %v537 = vunpack.c.h.b16 %v265
    %v538 = vunpack.c.l.b16 %v266
    %v539 = vunpack.c.h.b16 %v266
    %v540 = vunpack.c.l.b16 %v267
    %v541 = vunpack.c.h.b16 %v267
    %v542 = vunpack.c.l.b16 %v268
    %v543 = vunpack.c.h.b16 %v268
    %v544 = vunpack.c.l.b16 %v269
    %v545 = vunpack.c.h.b16 %v269
    %v546 = vunpack.c.l.b16 %v270
    %v547 = vunpack.c.h.b16 %v270
    %v548 = vunpack.c.l.b16 %v271
    %v549 = vunpack.c.h.b16 %v271
    %v550 = vunpack.c.l.b16 %v272
    %v551 = vunpack.c.h.b16 %v272
    %v552 = vunpack.c.l.b16 %v273
    %v553 = vunpack.c.h.b16 %v273
    %v554 = vunpack.c.l.b16 %v274
    %v555 = vunpack.c.h.b16 %v274
    %v556 = vunpack.c.l.b16 %v275
    %v557 = vunpack.c.h.b16 %v275
    %v558 = vunpack.c.l.b16 %v276
    %v559 = vunpack.c.h.b16 %v276
    %v560 = vunpack.c.l.b16 %v277
    %v561 = vunpack.c.h.b16 %v277
    %v562 = vunpack.c.l.b16 %v278
    %v563 = vunpack.c.h.b16 %v278
    %v564 = vunpack.c.l.b16 %v279
    %v565 = vunpack.c.h.b16 %v279
    %v566 = vunpack.c.l.b16 %v280
    %v567 = vunpack.c.h.b16 %v280
    %v568 = vunpack.c.l.b16 %v281
    %v569 = vunpack.c.h.b16 %v281
    %v570 = vunpack.c.l.b16 %v282
    %v571 = vunpack.c.h.b16 %v282
    %v572 = vunpack.c.l.b16 %v283
    %v573 = vunpack.c.h.b16 %v283
    %v574 = vunpack.c.l.b16 %v284
    %v575 = vunpack.c.h.b16 %v284
    %v576 = vunpack.c.l.b16 %v285
    %v577 = vunpack.c.h.b16 %v285
    %v578 = vunpack.c.l.b16 %v286
    %v579 = vunpack.c.h.b16 %v286
    %v580 = vunpack.c.l.b16 %v287
    %v581 = vunpack.c.h.b16 %v287
    %v582 = vunpack.c.l.b16 %v288
    %v583 = vunpack.c.h.b16 %v288
    %v584 = vunpack.c.l.b16 %v289
    %v585 = vunpack.c.h.b16 %v289
    %v586 = vunpack.c.l.b16 %v290
    %v587 = vunpack.c.h.b16 %v290
    %v588 = vunpack.c.l.b16 %v291
    %v589 = vunpack.c.h.b16 %v291
    %v590 = vunpack.c.l.b16 %v292
    %v591 = vunpack.c.h.b16 %v292
    %v592 = vunpack.c.l.b16 %v293
    %v593 = vunpack.c.h.b16 %v293
    %v594 = vpack.c.b16 %v400, %v398
    %v595 = vpack.c.b16 %v401, %v399
    %v596 = vpack.c.b16 %v404, %v402
    %v597 = vpack.c.b16 %v405, %v403
    %v598 = vpack.c.b16 %v408, %v406
    %v599 = vpack.c.b16 %v409, %v407
    %v600 = vpack.c.b16 %v412, %v410
    %v601 = vpack.c.b16 %v413, %v411
    %v602 = vpack.c.b16 %v416, %v414
    %v603 = vpack.c.b16 %v417, %v415
    %v604 = vpack.c.b16 %v420, %v418
    %v605 = vpack.c.b16 %v421, %v419
    %v606 = vpack.c.b16 %v424, %v422
    %v607 = vpack.c.b16 %v425, %v423
    %v608 = vpack.c.b16 %v428, %v426
    %v609 = vpack.c.b16 %v429, %v427
    %v610 = vpack.c.b16 %v432, %v430
    %v611 = vpack.c.b16 %v433, %v431
    %v612 = vpack.c.b16 %v436, %v434
    %v613 = vpack.c.b16 %v437, %v435
    %v614 = vpack.c.b16 %v440, %v438
    %v615 = vpack.c.b16 %v441, %v439
    %v616 = vpack.c.b16 %v444, %v442
    %v617 = vpack.c.b16 %v445, %v443
    %v618 = vpack.c.b16 %v448, %v446
    %v619 = vpack.c.b16 %v449, %v447
    %v620 = vpack.c.b16 %v452, %v450
    %v621 = vpack.c.b16 %v453, %v451
    %v622 = vpack.c.b16 %v456, %v454
    %v623 = vpack.c.b16 %v457, %v455
    %v624 = vpack.c.b16 %v460, %v458
    %v625 = vpack.c.b16 %v461, %v459
    %v626 = vpack.c.b16 %v464, %v462
    %v627 = vpack.c.b16 %v465, %v463
    %v628 = vpack.c.b16 %v468, %v466
    %v629 = vpack.c.b16 %v469, %v467
    %v630 = vpack.c.b16 %v472, %v470
    %v631 = vpack.c.b16 %v473, %v471
    %v632 = vpack.c.b16 %v476, %v474
    %v633 = vpack.c.b16 %v477, %v475
    %v634 = vpack.c.b16 %v480, %v478
    %v635 = vpack.c.b16 %v481, %v479
    %v636 = vpack.c.b16 %v484, %v482
    %v637 = vpack.c.b16 %v485, %v483
    %v638 = vpack.c.b16 %v488, %v486
    %v639 = vpack.c.b16 %v489, %v487
    %v640 = vpack.c.b16 %v492, %v490
    %v641 = vpack.c.b16 %v493, %v491
    %v642 = vpack.c.b16 %v496, %v494
    %v643 = vpack.c.b16 %v497, %v495
    %v644 = vpack.c.b16 %v500, %v498
    %v645 = vpack.c.b16 %v501, %v499
    %v646 = vpack.c.b16 %v504, %v502
    %v647 = vpack.c.b16 %v505, %v503
    %v648 = vpack.c.b16 %v508, %v506
    %v649 = vpack.c.b16 %v509, %v507
    %v650 = vpack.c.b16 %v512, %v510
    %v651 = vpack.c.b16 %v513, %v511
    %v652 = vpack.c.b16 %v516, %v514
    %v653 = vpack.c.b16 %v517, %v515
    %v654 = vpack.c.b16 %v520, %v518
    %v655 = vpack.c.b16 %v521, %v519
    %v656 = vpack.c.b16 %v524, %v522
    %v657 = vpack.c.b16 %v525, %v523
    %v658 = vpack.c.b16 %v528, %v526
    %v659 = vpack.c.b16 %v529, %v527
    %v660 = vpack.c.b16 %v532, %v530
    %v661 = vpack.c.b16 %v533, %v531
    %v662 = vpack.c.b16 %v536, %v534
    %v663 = vpack.c.b16 %v537, %v535
    %v664 = vpack.c.b16 %v540, %v538
    %v665 = vpack.c.b16 %v541, %v539
    %v666 = vpack.c.b16 %v544, %v542
    %v667 = vpack.c.b16 %v545, %v543
    %v668 = vpack.c.b16 %v548, %v546
    %v669 = vpack.c.b16 %v549, %v547
    %v670 = vpack.c.b16 %v552, %v550
    %v671 = vpack.c.b16 %v553, %v551
    %v672 = vpack.c.b16 %v556, %v554
    %v673 = vpack.c.b16 %v557, %v555
    %v674 = vpack.c.b16 %v560, %v558
    %v675 = vpack.c.b16 %v561, %v559
    %v676 = vpack.c.b16 %v564, %v562
    %v677 = vpack.c.b16 %v565, %v563
    %v678 = vpack.c.b16 %v568, %v566
    %v679 = vpack.c.b16 %v569, %v567
    %v680 = vpack.c.b16 %v572, %v570
    %v681 = vpack.c.b16 %v573, %v571
    %v682 = vpack.c.b16 %v576, %v574
    %v683 = vpack.c.b16 %v577, %v575
    %v684 = vpack.c.b16 %v580, %v578
    %v685 = vpack.c.b16 %v581, %v579
    %v686 = vpack.c.b16 %v584, %v582
    %v687 = vpack.c.b16 %v585, %v583
    %v688 = vpack.c.b16 %v588, %v586
    %v689 = vpack.c.b16 %v589, %v587
    %v690 = vpack.c.b16 %v592, %v590
    %v691 = vpack.c.b16 %v593, %v591
    %vm790 = vcmask 130048
    %v792 = vsel %vm790, %v146, 0
    %v795 = vsel %vm790, %v153, 0
    %v798 = vsel %vm790, %v160, 0
    %v801 = vsel %vm790, %v167, 0
    %v804 = vsel %vm790, %v174, 0
    %v807 = vsel %vm790, %v181, 0
    %v810 = vsel %vm790, %v188, 0
    %v813 = vsel %vm790, %v195, 0
    %815 = vmatpush.bf16.msra.mxu0 %v608
    %816 = vmatpush.bf16.msra.mxu0 %v606
    %817 = vmatpush.bf16.msra.mxu0 %v604
    %818 = vmatpush.bf16.msra.mxu0 %v602
    %819 = vmatpush.bf16.msra.mxu0 %v600
    %820 = vmatpush.bf16.msra.mxu0 %v598
    %821 = vmatpush.bf16.msra.mxu0 %v596
    %822 = vmatpush.bf16.msra.mxu0 %v594
    %823 = vmatmul.bf16.gmra.mxu0 %v140
    %v824 = vpop.f32.mrf.mxu0
    %v825 = vadd.f32 %v296, %v824
    %v826 = vpop.f32.mrf.mxu0
    %v827 = vadd.f32 %v296, %v826
    %828 = vmatmul.bf16.gmra.mxu0 %v147
    %v829 = vpop.f32.mrf.mxu0
    %v830 = vadd.f32 %v296, %v829
    %v831 = vpop.f32.mrf.mxu0
    %v832 = vadd.f32 %v296, %v831
    %833 = vmatmul.bf16.gmra.mxu0 %v154
    %v834 = vpop.f32.mrf.mxu0
    %v835 = vadd.f32 %v296, %v834
    %v836 = vpop.f32.mrf.mxu0
    %v837 = vadd.f32 %v296, %v836
    %838 = vmatmul.bf16.gmra.mxu0 %v161
    %v839 = vpop.f32.mrf.mxu0
    %v840 = vadd.f32 %v296, %v839
    %v841 = vpop.f32.mrf.mxu0
    %v842 = vadd.f32 %v296, %v841
    %843 = vmatmul.bf16.gmra.mxu0 %v168
    %v844 = vpop.f32.mrf.mxu0
    %v845 = vadd.f32 %v296, %v844
    %v846 = vpop.f32.mrf.mxu0
    %v847 = vadd.f32 %v296, %v846
    %848 = vmatmul.bf16.gmra.mxu0 %v175
    %v849 = vpop.f32.mrf.mxu0
    %v850 = vadd.f32 %v296, %v849
    %v851 = vpop.f32.mrf.mxu0
    %v852 = vadd.f32 %v296, %v851
    %853 = vmatmul.bf16.gmra.mxu0 %v182
    %v854 = vpop.f32.mrf.mxu0
    %v855 = vadd.f32 %v296, %v854
    %v856 = vpop.f32.mrf.mxu0
    %v857 = vadd.f32 %v296, %v856
    %858 = vmatmul.bf16.gmra.mxu0 %v189
    %v859 = vpop.f32.mrf.mxu0
    %v860 = vadd.f32 %v296, %v859
    %v861 = vpop.f32.mrf.mxu0
    %v862 = vadd.f32 %v296, %v861
    %863 = vdwg.mxu0
    %864 = vmatpush.bf16.msra.mxu0 %v624
    %865 = vmatpush.bf16.msra.mxu0 %v622
    %866 = vmatpush.bf16.msra.mxu0 %v620
    %867 = vmatpush.bf16.msra.mxu0 %v618
    %868 = vmatpush.bf16.msra.mxu0 %v616
    %869 = vmatpush.bf16.msra.mxu0 %v614
    %870 = vmatpush.bf16.msra.mxu0 %v612
    %871 = vmatpush.bf16.msra.mxu0 %v610
    %872 = vmatmul.bf16.gmra.mxu0 %v141
    %v873 = vpop.f32.mrf.mxu0
    %v874 = vadd.f32 %v825, %v873
    %v875 = vpop.f32.mrf.mxu0
    %v876 = vadd.f32 %v827, %v875
    %877 = vmatmul.bf16.gmra.mxu0 %v148
    %v878 = vpop.f32.mrf.mxu0
    %v879 = vadd.f32 %v830, %v878
    %v880 = vpop.f32.mrf.mxu0
    %v881 = vadd.f32 %v832, %v880
    %882 = vmatmul.bf16.gmra.mxu0 %v155
    %v883 = vpop.f32.mrf.mxu0
    %v884 = vadd.f32 %v835, %v883
    %v885 = vpop.f32.mrf.mxu0
    %v886 = vadd.f32 %v837, %v885
    %887 = vmatmul.bf16.gmra.mxu0 %v162
    %v888 = vpop.f32.mrf.mxu0
    %v889 = vadd.f32 %v840, %v888
    %v890 = vpop.f32.mrf.mxu0
    %v891 = vadd.f32 %v842, %v890
    %892 = vmatmul.bf16.gmra.mxu0 %v169
    %v893 = vpop.f32.mrf.mxu0
    %v894 = vadd.f32 %v845, %v893
    %v895 = vpop.f32.mrf.mxu0
    %v896 = vadd.f32 %v847, %v895
    %897 = vmatmul.bf16.gmra.mxu0 %v176
    %v898 = vpop.f32.mrf.mxu0
    %v899 = vadd.f32 %v850, %v898
    %v900 = vpop.f32.mrf.mxu0
    %v901 = vadd.f32 %v852, %v900
    %902 = vmatmul.bf16.gmra.mxu0 %v183
    %v903 = vpop.f32.mrf.mxu0
    %v904 = vadd.f32 %v855, %v903
    %v905 = vpop.f32.mrf.mxu0
    %v906 = vadd.f32 %v857, %v905
    %907 = vmatmul.bf16.gmra.mxu0 %v190
    %v908 = vpop.f32.mrf.mxu0
    %v909 = vadd.f32 %v860, %v908
    %v910 = vpop.f32.mrf.mxu0
    %v911 = vadd.f32 %v862, %v910
    %912 = vdwg.mxu0
    %913 = vmatpush.bf16.msra.mxu0 %v640
    %914 = vmatpush.bf16.msra.mxu0 %v638
    %915 = vmatpush.bf16.msra.mxu0 %v636
    %916 = vmatpush.bf16.msra.mxu0 %v634
    %917 = vmatpush.bf16.msra.mxu0 %v632
    %918 = vmatpush.bf16.msra.mxu0 %v630
    %919 = vmatpush.bf16.msra.mxu0 %v628
    %920 = vmatpush.bf16.msra.mxu0 %v626
    %921 = vmatmul.bf16.gmra.mxu0 %v142
    %v922 = vpop.f32.mrf.mxu0
    %v923 = vadd.f32 %v874, %v922
    %v924 = vpop.f32.mrf.mxu0
    %v925 = vadd.f32 %v876, %v924
    %926 = vmatmul.bf16.gmra.mxu0 %v149
    %v927 = vpop.f32.mrf.mxu0
    %v928 = vadd.f32 %v879, %v927
    %v929 = vpop.f32.mrf.mxu0
    %v930 = vadd.f32 %v881, %v929
    %931 = vmatmul.bf16.gmra.mxu0 %v156
    %v932 = vpop.f32.mrf.mxu0
    %v933 = vadd.f32 %v884, %v932
    %v934 = vpop.f32.mrf.mxu0
    %v935 = vadd.f32 %v886, %v934
    %936 = vmatmul.bf16.gmra.mxu0 %v163
    %v937 = vpop.f32.mrf.mxu0
    %v938 = vadd.f32 %v889, %v937
    %v939 = vpop.f32.mrf.mxu0
    %v940 = vadd.f32 %v891, %v939
    %941 = vmatmul.bf16.gmra.mxu0 %v170
    %v942 = vpop.f32.mrf.mxu0
    %v943 = vadd.f32 %v894, %v942
    %v944 = vpop.f32.mrf.mxu0
    %v945 = vadd.f32 %v896, %v944
    %946 = vmatmul.bf16.gmra.mxu0 %v177
    %v947 = vpop.f32.mrf.mxu0
    %v948 = vadd.f32 %v899, %v947
    %v949 = vpop.f32.mrf.mxu0
    %v950 = vadd.f32 %v901, %v949
    %951 = vmatmul.bf16.gmra.mxu0 %v184
    %v952 = vpop.f32.mrf.mxu0
    %v953 = vadd.f32 %v904, %v952
    %v954 = vpop.f32.mrf.mxu0
    %v955 = vadd.f32 %v906, %v954
    %956 = vmatmul.bf16.gmra.mxu0 %v191
    %v957 = vpop.f32.mrf.mxu0
    %v958 = vadd.f32 %v909, %v957
    %v959 = vpop.f32.mrf.mxu0
    %v960 = vadd.f32 %v911, %v959
    %961 = vdwg.mxu0
    %962 = vmatpush.bf16.msra.mxu0 %v656
    %963 = vmatpush.bf16.msra.mxu0 %v654
    %964 = vmatpush.bf16.msra.mxu0 %v652
    %965 = vmatpush.bf16.msra.mxu0 %v650
    %966 = vmatpush.bf16.msra.mxu0 %v648
    %967 = vmatpush.bf16.msra.mxu0 %v646
    %968 = vmatpush.bf16.msra.mxu0 %v644
    %969 = vmatpush.bf16.msra.mxu0 %v642
    %970 = vmatmul.bf16.gmra.mxu0 %v143
    %v971 = vpop.f32.mrf.mxu0
    %v972 = vadd.f32 %v923, %v971
    %v973 = vpop.f32.mrf.mxu0
    %v974 = vadd.f32 %v925, %v973
    %975 = vmatmul.bf16.gmra.mxu0 %v150
    %v976 = vpop.f32.mrf.mxu0
    %v977 = vadd.f32 %v928, %v976
    %v978 = vpop.f32.mrf.mxu0
    %v979 = vadd.f32 %v930, %v978
    %980 = vmatmul.bf16.gmra.mxu0 %v157
    %v981 = vpop.f32.mrf.mxu0
    %v982 = vadd.f32 %v933, %v981
    %v983 = vpop.f32.mrf.mxu0
    %v984 = vadd.f32 %v935, %v983
    %985 = vmatmul.bf16.gmra.mxu0 %v164
    %v986 = vpop.f32.mrf.mxu0
    %v987 = vadd.f32 %v938, %v986
    %v988 = vpop.f32.mrf.mxu0
    %v989 = vadd.f32 %v940, %v988
    %990 = vmatmul.bf16.gmra.mxu0 %v171
    %v991 = vpop.f32.mrf.mxu0
    %v992 = vadd.f32 %v943, %v991
    %v993 = vpop.f32.mrf.mxu0
    %v994 = vadd.f32 %v945, %v993
    %995 = vmatmul.bf16.gmra.mxu0 %v178
    %v996 = vpop.f32.mrf.mxu0
    %v997 = vadd.f32 %v948, %v996
    %v998 = vpop.f32.mrf.mxu0
    %v999 = vadd.f32 %v950, %v998
    %1000 = vmatmul.bf16.gmra.mxu0 %v185
    %v1001 = vpop.f32.mrf.mxu0
    %v1002 = vadd.f32 %v953, %v1001
    %v1003 = vpop.f32.mrf.mxu0
    %v1004 = vadd.f32 %v955, %v1003
    %1005 = vmatmul.bf16.gmra.mxu0 %v192
    %v1006 = vpop.f32.mrf.mxu0
    %v1007 = vadd.f32 %v958, %v1006
    %v1008 = vpop.f32.mrf.mxu0
    %v1009 = vadd.f32 %v960, %v1008
    %1010 = vdwg.mxu0
    %1011 = vmatpush.bf16.msra.mxu0 %v672
    %1012 = vmatpush.bf16.msra.mxu0 %v670
    %1013 = vmatpush.bf16.msra.mxu0 %v668
    %1014 = vmatpush.bf16.msra.mxu0 %v666
    %1015 = vmatpush.bf16.msra.mxu0 %v664
    %1016 = vmatpush.bf16.msra.mxu0 %v662
    %1017 = vmatpush.bf16.msra.mxu0 %v660
    %1018 = vmatpush.bf16.msra.mxu0 %v658
    %1019 = vmatmul.bf16.gmra.mxu0 %v144
    %v1020 = vpop.f32.mrf.mxu0
    %v1021 = vadd.f32 %v972, %v1020
    %v1022 = vpop.f32.mrf.mxu0
    %v1023 = vadd.f32 %v974, %v1022
    %1024 = vmatmul.bf16.gmra.mxu0 %v151
    %v1025 = vpop.f32.mrf.mxu0
    %v1026 = vadd.f32 %v977, %v1025
    %v1027 = vpop.f32.mrf.mxu0
    %v1028 = vadd.f32 %v979, %v1027
    %1029 = vmatmul.bf16.gmra.mxu0 %v158
    %v1030 = vpop.f32.mrf.mxu0
    %v1031 = vadd.f32 %v982, %v1030
    %v1032 = vpop.f32.mrf.mxu0
    %v1033 = vadd.f32 %v984, %v1032
    %1034 = vmatmul.bf16.gmra.mxu0 %v165
    %v1035 = vpop.f32.mrf.mxu0
    %v1036 = vadd.f32 %v987, %v1035
    %v1037 = vpop.f32.mrf.mxu0
    %v1038 = vadd.f32 %v989, %v1037
    %1039 = vmatmul.bf16.gmra.mxu0 %v172
    %v1040 = vpop.f32.mrf.mxu0
    %v1041 = vadd.f32 %v992, %v1040
    %v1042 = vpop.f32.mrf.mxu0
    %v1043 = vadd.f32 %v994, %v1042
    %1044 = vmatmul.bf16.gmra.mxu0 %v179
    %v1045 = vpop.f32.mrf.mxu0
    %v1046 = vadd.f32 %v997, %v1045
    %v1047 = vpop.f32.mrf.mxu0
    %v1048 = vadd.f32 %v999, %v1047
    %1049 = vmatmul.bf16.gmra.mxu0 %v186
    %v1050 = vpop.f32.mrf.mxu0
    %v1051 = vadd.f32 %v1002, %v1050
    %v1052 = vpop.f32.mrf.mxu0
    %v1053 = vadd.f32 %v1004, %v1052
    %1054 = vmatmul.bf16.gmra.mxu0 %v193
    %v1055 = vpop.f32.mrf.mxu0
    %v1056 = vadd.f32 %v1007, %v1055
    %v1057 = vpop.f32.mrf.mxu0
    %v1058 = vadd.f32 %v1009, %v1057
    %1059 = vdwg.mxu0
    %1060 = vmatpush.bf16.msra.mxu0 %v688
    %1061 = vmatpush.bf16.msra.mxu0 %v686
    %1062 = vmatpush.bf16.msra.mxu0 %v684
    %1063 = vmatpush.bf16.msra.mxu0 %v682
    %1064 = vmatpush.bf16.msra.mxu0 %v680
    %1065 = vmatpush.bf16.msra.mxu0 %v678
    %1066 = vmatpush.bf16.msra.mxu0 %v676
    %1067 = vmatpush.bf16.msra.mxu0 %v674
    %1068 = vmatmul.bf16.gmra.mxu0 %v145
    %v1069 = vpop.f32.mrf.mxu0
    %v1070 = vadd.f32 %v1021, %v1069
    %v1071 = vpop.f32.mrf.mxu0
    %v1072 = vadd.f32 %v1023, %v1071
    %1073 = vmatmul.bf16.gmra.mxu0 %v152
    %v1074 = vpop.f32.mrf.mxu0
    %v1075 = vadd.f32 %v1026, %v1074
    %v1076 = vpop.f32.mrf.mxu0
    %v1077 = vadd.f32 %v1028, %v1076
    %1078 = vmatmul.bf16.gmra.mxu0 %v159
    %v1079 = vpop.f32.mrf.mxu0
    %v1080 = vadd.f32 %v1031, %v1079
    %v1081 = vpop.f32.mrf.mxu0
    %v1082 = vadd.f32 %v1033, %v1081
    %1083 = vmatmul.bf16.gmra.mxu0 %v166
    %v1084 = vpop.f32.mrf.mxu0
    %v1085 = vadd.f32 %v1036, %v1084
    %v1086 = vpop.f32.mrf.mxu0
    %v1087 = vadd.f32 %v1038, %v1086
    %1088 = vmatmul.bf16.gmra.mxu0 %v173
    %v1089 = vpop.f32.mrf.mxu0
    %v1090 = vadd.f32 %v1041, %v1089
    %v1091 = vpop.f32.mrf.mxu0
    %v1092 = vadd.f32 %v1043, %v1091
    %1093 = vmatmul.bf16.gmra.mxu0 %v180
    %v1094 = vpop.f32.mrf.mxu0
    %v1095 = vadd.f32 %v1046, %v1094
    %v1096 = vpop.f32.mrf.mxu0
    %v1097 = vadd.f32 %v1048, %v1096
    %1098 = vmatmul.bf16.gmra.mxu0 %v187
    %v1099 = vpop.f32.mrf.mxu0
    %v1100 = vadd.f32 %v1051, %v1099
    %v1101 = vpop.f32.mrf.mxu0
    %v1102 = vadd.f32 %v1053, %v1101
    %1103 = vmatmul.bf16.gmra.mxu0 %v194
    %v1104 = vpop.f32.mrf.mxu0
    %v1105 = vadd.f32 %v1056, %v1104
    %v1106 = vpop.f32.mrf.mxu0
    %v1107 = vadd.f32 %v1058, %v1106
    %1108 = vdwg.mxu0
    %1109 = vmatpush.bf16.msra.mxu0 0
    %1110 = vmatpush.bf16.msra.mxu0 0
    %1111 = vmatpush.bf16.msra.mxu0 0
    %1112 = vmatpush.bf16.msra.mxu0 0
    %1113 = vmatpush.bf16.msra.mxu0 0
    %1114 = vmatpush.bf16.msra.mxu0 0
    %1115 = vmatpush.bf16.msra.mxu0 0
    %1116 = vmatpush.bf16.msra.mxu0 %v690
    %1117 = vmatmul.bf16.gmra.mxu0 %v792
    %v1118 = vpop.f32.mrf.mxu0
    %v1119 = vadd.f32 %v1070, %v1118
    %v1120 = vpop.f32.mrf.mxu0
    %v1121 = vadd.f32 %v1072, %v1120
    %1122 = vmatmul.bf16.gmra.mxu0 %v795
    %v1123 = vpop.f32.mrf.mxu0
    %v1124 = vadd.f32 %v1075, %v1123
    %v1125 = vpop.f32.mrf.mxu0
    %v1126 = vadd.f32 %v1077, %v1125
    %1127 = vmatmul.bf16.gmra.mxu0 %v798
    %v1128 = vpop.f32.mrf.mxu0
    %v1129 = vadd.f32 %v1080, %v1128
    %v1130 = vpop.f32.mrf.mxu0
    %v1131 = vadd.f32 %v1082, %v1130
    %1132 = vmatmul.bf16.gmra.mxu0 %v801
    %v1133 = vpop.f32.mrf.mxu0
    %v1134 = vadd.f32 %v1085, %v1133
    %v1135 = vpop.f32.mrf.mxu0
    %v1136 = vadd.f32 %v1087, %v1135
    %1137 = vmatmul.bf16.gmra.mxu0 %v804
    %v1138 = vpop.f32.mrf.mxu0
    %v1139 = vadd.f32 %v1090, %v1138
    %v1140 = vpop.f32.mrf.mxu0
    %v1141 = vadd.f32 %v1092, %v1140
    %1142 = vmatmul.bf16.gmra.mxu0 %v807
    %v1143 = vpop.f32.mrf.mxu0
    %v1144 = vadd.f32 %v1095, %v1143
    %v1145 = vpop.f32.mrf.mxu0
    %v1146 = vadd.f32 %v1097, %v1145
    %1147 = vmatmul.bf16.gmra.mxu0 %v810
    %v1148 = vpop.f32.mrf.mxu0
    %v1149 = vadd.f32 %v1100, %v1148
    %v1150 = vpop.f32.mrf.mxu0
    %v1151 = vadd.f32 %v1102, %v1150
    %1152 = vmatmul.bf16.gmra.mxu0 %v813
    %v1153 = vpop.f32.mrf.mxu0
    %v1154 = vadd.f32 %v1105, %v1153
    %v1155 = vpop.f32.mrf.mxu0
    %v1156 = vadd.f32 %v1107, %v1155
    %1157 = vdwg.mxu0
    %1158 = vmatpush.bf16.msra.mxu0 %v609
    %1159 = vmatpush.bf16.msra.mxu0 %v607
    %1160 = vmatpush.bf16.msra.mxu0 %v605
    %1161 = vmatpush.bf16.msra.mxu0 %v603
    %1162 = vmatpush.bf16.msra.mxu0 %v601
    %1163 = vmatpush.bf16.msra.mxu0 %v599
    %1164 = vmatpush.bf16.msra.mxu0 %v597
    %1165 = vmatpush.bf16.msra.mxu0 %v595
    %1166 = vmatmul.bf16.gmra.mxu0 %v140
    %v1167 = vpop.f32.mrf.mxu0
    %v1168 = vadd.f32 %v297, %v1167
    %v1169 = vpop.f32.mrf.mxu0
    %v1170 = vadd.f32 %v297, %v1169
    %1171 = vmatmul.bf16.gmra.mxu0 %v147
    %v1172 = vpop.f32.mrf.mxu0
    %v1173 = vadd.f32 %v297, %v1172
    %v1174 = vpop.f32.mrf.mxu0
    %v1175 = vadd.f32 %v297, %v1174
    %1176 = vmatmul.bf16.gmra.mxu0 %v154
    %v1177 = vpop.f32.mrf.mxu0
    %v1178 = vadd.f32 %v297, %v1177
    %v1179 = vpop.f32.mrf.mxu0
    %v1180 = vadd.f32 %v297, %v1179
    %1181 = vmatmul.bf16.gmra.mxu0 %v161
    %v1182 = vpop.f32.mrf.mxu0
    %v1183 = vadd.f32 %v297, %v1182
    %v1184 = vpop.f32.mrf.mxu0
    %v1185 = vadd.f32 %v297, %v1184
    %1186 = vmatmul.bf16.gmra.mxu0 %v168
    %v1187 = vpop.f32.mrf.mxu0
    %v1188 = vadd.f32 %v297, %v1187
    %v1189 = vpop.f32.mrf.mxu0
    %v1190 = vadd.f32 %v297, %v1189
    %1191 = vmatmul.bf16.gmra.mxu0 %v175
    %v1192 = vpop.f32.mrf.mxu0
    %v1193 = vadd.f32 %v297, %v1192
    %v1194 = vpop.f32.mrf.mxu0
    %v1195 = vadd.f32 %v297, %v1194
    %1196 = vmatmul.bf16.gmra.mxu0 %v182
    %v1197 = vpop.f32.mrf.mxu0
    %v1198 = vadd.f32 %v297, %v1197
    %v1199 = vpop.f32.mrf.mxu0
    %v1200 = vadd.f32 %v297, %v1199
    %1201 = vmatmul.bf16.gmra.mxu0 %v189
    %v1202 = vpop.f32.mrf.mxu0
    %v1203 = vadd.f32 %v297, %v1202
    %v1204 = vpop.f32.mrf.mxu0
    %v1205 = vadd.f32 %v297, %v1204
    %1206 = vdwg.mxu0
    %1207 = vmatpush.bf16.msra.mxu0 %v625
    %1208 = vmatpush.bf16.msra.mxu0 %v623
    %1209 = vmatpush.bf16.msra.mxu0 %v621
    %1210 = vmatpush.bf16.msra.mxu0 %v619
    %1211 = vmatpush.bf16.msra.mxu0 %v617
    %1212 = vmatpush.bf16.msra.mxu0 %v615
    %1213 = vmatpush.bf16.msra.mxu0 %v613
    %1214 = vmatpush.bf16.msra.mxu0 %v611
    %1215 = vmatmul.bf16.gmra.mxu0 %v141
    %v1216 = vpop.f32.mrf.mxu0
    %v1217 = vadd.f32 %v1168, %v1216
    %v1218 = vpop.f32.mrf.mxu0
    %v1219 = vadd.f32 %v1170, %v1218
    %1220 = vmatmul.bf16.gmra.mxu0 %v148
    %v1221 = vpop.f32.mrf.mxu0
    %v1222 = vadd.f32 %v1173, %v1221
    %v1223 = vpop.f32.mrf.mxu0
    %v1224 = vadd.f32 %v1175, %v1223
    %1225 = vmatmul.bf16.gmra.mxu0 %v155
    %v1226 = vpop.f32.mrf.mxu0
    %v1227 = vadd.f32 %v1178, %v1226
    %v1228 = vpop.f32.mrf.mxu0
    %v1229 = vadd.f32 %v1180, %v1228
    %1230 = vmatmul.bf16.gmra.mxu0 %v162
    %v1231 = vpop.f32.mrf.mxu0
    %v1232 = vadd.f32 %v1183, %v1231
    %v1233 = vpop.f32.mrf.mxu0
    %v1234 = vadd.f32 %v1185, %v1233
    %1235 = vmatmul.bf16.gmra.mxu0 %v169
    %v1236 = vpop.f32.mrf.mxu0
    %v1237 = vadd.f32 %v1188, %v1236
    %v1238 = vpop.f32.mrf.mxu0
    %v1239 = vadd.f32 %v1190, %v1238
    %1240 = vmatmul.bf16.gmra.mxu0 %v176
    %v1241 = vpop.f32.mrf.mxu0
    %v1242 = vadd.f32 %v1193, %v1241
    %v1243 = vpop.f32.mrf.mxu0
    %v1244 = vadd.f32 %v1195, %v1243
    %1245 = vmatmul.bf16.gmra.mxu0 %v183
    %v1246 = vpop.f32.mrf.mxu0
    %v1247 = vadd.f32 %v1198, %v1246
    %v1248 = vpop.f32.mrf.mxu0
    %v1249 = vadd.f32 %v1200, %v1248
    %1250 = vmatmul.bf16.gmra.mxu0 %v190
    %v1251 = vpop.f32.mrf.mxu0
    %v1252 = vadd.f32 %v1203, %v1251
    %v1253 = vpop.f32.mrf.mxu0
    %v1254 = vadd.f32 %v1205, %v1253
    %1255 = vdwg.mxu0
    %1256 = vmatpush.bf16.msra.mxu0 %v641
    %1257 = vmatpush.bf16.msra.mxu0 %v639
    %1258 = vmatpush.bf16.msra.mxu0 %v637
    %1259 = vmatpush.bf16.msra.mxu0 %v635
    %1260 = vmatpush.bf16.msra.mxu0 %v633
    %1261 = vmatpush.bf16.msra.mxu0 %v631
    %1262 = vmatpush.bf16.msra.mxu0 %v629
    %1263 = vmatpush.bf16.msra.mxu0 %v627
    %1264 = vmatmul.bf16.gmra.mxu0 %v142
    %v1265 = vpop.f32.mrf.mxu0
    %v1266 = vadd.f32 %v1217, %v1265
    %v1267 = vpop.f32.mrf.mxu0
    %v1268 = vadd.f32 %v1219, %v1267
    %1269 = vmatmul.bf16.gmra.mxu0 %v149
    %v1270 = vpop.f32.mrf.mxu0
    %v1271 = vadd.f32 %v1222, %v1270
    %v1272 = vpop.f32.mrf.mxu0
    %v1273 = vadd.f32 %v1224, %v1272
    %1274 = vmatmul.bf16.gmra.mxu0 %v156
    %v1275 = vpop.f32.mrf.mxu0
    %v1276 = vadd.f32 %v1227, %v1275
    %v1277 = vpop.f32.mrf.mxu0
    %v1278 = vadd.f32 %v1229, %v1277
    %1279 = vmatmul.bf16.gmra.mxu0 %v163
    %v1280 = vpop.f32.mrf.mxu0
    %v1281 = vadd.f32 %v1232, %v1280
    %v1282 = vpop.f32.mrf.mxu0
    %v1283 = vadd.f32 %v1234, %v1282
    %1284 = vmatmul.bf16.gmra.mxu0 %v170
    %v1285 = vpop.f32.mrf.mxu0
    %v1286 = vadd.f32 %v1237, %v1285
    %v1287 = vpop.f32.mrf.mxu0
    %v1288 = vadd.f32 %v1239, %v1287
    %1289 = vmatmul.bf16.gmra.mxu0 %v177
    %v1290 = vpop.f32.mrf.mxu0
    %v1291 = vadd.f32 %v1242, %v1290
    %v1292 = vpop.f32.mrf.mxu0
    %v1293 = vadd.f32 %v1244, %v1292
    %1294 = vmatmul.bf16.gmra.mxu0 %v184
    %v1295 = vpop.f32.mrf.mxu0
    %v1296 = vadd.f32 %v1247, %v1295
    %v1297 = vpop.f32.mrf.mxu0
    %v1298 = vadd.f32 %v1249, %v1297
    %1299 = vmatmul.bf16.gmra.mxu0 %v191
    %v1300 = vpop.f32.mrf.mxu0
    %v1301 = vadd.f32 %v1252, %v1300
    %v1302 = vpop.f32.mrf.mxu0
    %v1303 = vadd.f32 %v1254, %v1302
    %1304 = vdwg.mxu0
    %1305 = vmatpush.bf16.msra.mxu0 %v657
    %1306 = vmatpush.bf16.msra.mxu0 %v655
    %1307 = vmatpush.bf16.msra.mxu0 %v653
    %1308 = vmatpush.bf16.msra.mxu0 %v651
    %1309 = vmatpush.bf16.msra.mxu0 %v649
    %1310 = vmatpush.bf16.msra.mxu0 %v647
    %1311 = vmatpush.bf16.msra.mxu0 %v645
    %1312 = vmatpush.bf16.msra.mxu0 %v643
    %1313 = vmatmul.bf16.gmra.mxu0 %v143
    %v1314 = vpop.f32.mrf.mxu0
    %v1315 = vadd.f32 %v1266, %v1314
    %v1316 = vpop.f32.mrf.mxu0
    %v1317 = vadd.f32 %v1268, %v1316
    %1318 = vmatmul.bf16.gmra.mxu0 %v150
    %v1319 = vpop.f32.mrf.mxu0
    %v1320 = vadd.f32 %v1271, %v1319
    %v1321 = vpop.f32.mrf.mxu0
    %v1322 = vadd.f32 %v1273, %v1321
    %1323 = vmatmul.bf16.gmra.mxu0 %v157
    %v1324 = vpop.f32.mrf.mxu0
    %v1325 = vadd.f32 %v1276, %v1324
    %v1326 = vpop.f32.mrf.mxu0
    %v1327 = vadd.f32 %v1278, %v1326
    %1328 = vmatmul.bf16.gmra.mxu0 %v164
    %v1329 = vpop.f32.mrf.mxu0
    %v1330 = vadd.f32 %v1281, %v1329
    %v1331 = vpop.f32.mrf.mxu0
    %v1332 = vadd.f32 %v1283, %v1331
    %1333 = vmatmul.bf16.gmra.mxu0 %v171
    %v1334 = vpop.f32.mrf.mxu0
    %v1335 = vadd.f32 %v1286, %v1334
    %v1336 = vpop.f32.mrf.mxu0
    %v1337 = vadd.f32 %v1288, %v1336
    %1338 = vmatmul.bf16.gmra.mxu0 %v178
    %v1339 = vpop.f32.mrf.mxu0
    %v1340 = vadd.f32 %v1291, %v1339
    %v1341 = vpop.f32.mrf.mxu0
    %v1342 = vadd.f32 %v1293, %v1341
    %1343 = vmatmul.bf16.gmra.mxu0 %v185
    %v1344 = vpop.f32.mrf.mxu0
    %v1345 = vadd.f32 %v1296, %v1344
    %v1346 = vpop.f32.mrf.mxu0
    %v1347 = vadd.f32 %v1298, %v1346
    %1348 = vmatmul.bf16.gmra.mxu0 %v192
    %v1349 = vpop.f32.mrf.mxu0
    %v1350 = vadd.f32 %v1301, %v1349
    %v1351 = vpop.f32.mrf.mxu0
    %v1352 = vadd.f32 %v1303, %v1351
    %1353 = vdwg.mxu0
    %1354 = vmatpush.bf16.msra.mxu0 %v673
    %1355 = vmatpush.bf16.msra.mxu0 %v671
    %1356 = vmatpush.bf16.msra.mxu0 %v669
    %1357 = vmatpush.bf16.msra.mxu0 %v667
    %1358 = vmatpush.bf16.msra.mxu0 %v665
    %1359 = vmatpush.bf16.msra.mxu0 %v663
    %1360 = vmatpush.bf16.msra.mxu0 %v661
    %1361 = vmatpush.bf16.msra.mxu0 %v659
    %1362 = vmatmul.bf16.gmra.mxu0 %v144
    %v1363 = vpop.f32.mrf.mxu0
    %v1364 = vadd.f32 %v1315, %v1363
    %v1365 = vpop.f32.mrf.mxu0
    %v1366 = vadd.f32 %v1317, %v1365
    %1367 = vmatmul.bf16.gmra.mxu0 %v151
    %v1368 = vpop.f32.mrf.mxu0
    %v1369 = vadd.f32 %v1320, %v1368
    %v1370 = vpop.f32.mrf.mxu0
    %v1371 = vadd.f32 %v1322, %v1370
    %1372 = vmatmul.bf16.gmra.mxu0 %v158
    %v1373 = vpop.f32.mrf.mxu0
    %v1374 = vadd.f32 %v1325, %v1373
    %v1375 = vpop.f32.mrf.mxu0
    %v1376 = vadd.f32 %v1327, %v1375
    %1377 = vmatmul.bf16.gmra.mxu0 %v165
    %v1378 = vpop.f32.mrf.mxu0
    %v1379 = vadd.f32 %v1330, %v1378
    %v1380 = vpop.f32.mrf.mxu0
    %v1381 = vadd.f32 %v1332, %v1380
    %1382 = vmatmul.bf16.gmra.mxu0 %v172
    %v1383 = vpop.f32.mrf.mxu0
    %v1384 = vadd.f32 %v1335, %v1383
    %v1385 = vpop.f32.mrf.mxu0
    %v1386 = vadd.f32 %v1337, %v1385
    %1387 = vmatmul.bf16.gmra.mxu0 %v179
    %v1388 = vpop.f32.mrf.mxu0
    %v1389 = vadd.f32 %v1340, %v1388
    %v1390 = vpop.f32.mrf.mxu0
    %v1391 = vadd.f32 %v1342, %v1390
    %1392 = vmatmul.bf16.gmra.mxu0 %v186
    %v1393 = vpop.f32.mrf.mxu0
    %v1394 = vadd.f32 %v1345, %v1393
    %v1395 = vpop.f32.mrf.mxu0
    %v1396 = vadd.f32 %v1347, %v1395
    %1397 = vmatmul.bf16.gmra.mxu0 %v193
    %v1398 = vpop.f32.mrf.mxu0
    %v1399 = vadd.f32 %v1350, %v1398
    %v1400 = vpop.f32.mrf.mxu0
    %v1401 = vadd.f32 %v1352, %v1400
    %1402 = vdwg.mxu0
    %1403 = vmatpush.bf16.msra.mxu0 %v689
    %1404 = vmatpush.bf16.msra.mxu0 %v687
    %1405 = vmatpush.bf16.msra.mxu0 %v685
    %1406 = vmatpush.bf16.msra.mxu0 %v683
    %1407 = vmatpush.bf16.msra.mxu0 %v681
    %1408 = vmatpush.bf16.msra.mxu0 %v679
    %1409 = vmatpush.bf16.msra.mxu0 %v677
    %1410 = vmatpush.bf16.msra.mxu0 %v675
    %1411 = vmatmul.bf16.gmra.mxu0 %v145
    %v1412 = vpop.f32.mrf.mxu0
    %v1413 = vadd.f32 %v1364, %v1412
    %v1414 = vpop.f32.mrf.mxu0
    %v1415 = vadd.f32 %v1366, %v1414
    %1416 = vmatmul.bf16.gmra.mxu0 %v152
    %v1417 = vpop.f32.mrf.mxu0
    %v1418 = vadd.f32 %v1369, %v1417
    %v1419 = vpop.f32.mrf.mxu0
    %v1420 = vadd.f32 %v1371, %v1419
    %1421 = vmatmul.bf16.gmra.mxu0 %v159
    %v1422 = vpop.f32.mrf.mxu0
    %v1423 = vadd.f32 %v1374, %v1422
    %v1424 = vpop.f32.mrf.mxu0
    %v1425 = vadd.f32 %v1376, %v1424
    %1426 = vmatmul.bf16.gmra.mxu0 %v166
    %v1427 = vpop.f32.mrf.mxu0
    %v1428 = vadd.f32 %v1379, %v1427
    %v1429 = vpop.f32.mrf.mxu0
    %v1430 = vadd.f32 %v1381, %v1429
    %1431 = vmatmul.bf16.gmra.mxu0 %v173
    %v1432 = vpop.f32.mrf.mxu0
    %v1433 = vadd.f32 %v1384, %v1432
    %v1434 = vpop.f32.mrf.mxu0
    %v1435 = vadd.f32 %v1386, %v1434
    %1436 = vmatmul.bf16.gmra.mxu0 %v180
    %v1437 = vpop.f32.mrf.mxu0
    %v1438 = vadd.f32 %v1389, %v1437
    %v1439 = vpop.f32.mrf.mxu0
    %v1440 = vadd.f32 %v1391, %v1439
    %1441 = vmatmul.bf16.gmra.mxu0 %v187
    %v1442 = vpop.f32.mrf.mxu0
    %v1443 = vadd.f32 %v1394, %v1442
    %v1444 = vpop.f32.mrf.mxu0
    %v1445 = vadd.f32 %v1396, %v1444
    %1446 = vmatmul.bf16.gmra.mxu0 %v194
    %v1447 = vpop.f32.mrf.mxu0
    %v1448 = vadd.f32 %v1399, %v1447
    %v1449 = vpop.f32.mrf.mxu0
    %v1450 = vadd.f32 %v1401, %v1449
    %1451 = vdwg.mxu0
    %1452 = vmatpush.bf16.msra.mxu0 0
    %1453 = vmatpush.bf16.msra.mxu0 0
    %1454 = vmatpush.bf16.msra.mxu0 0
    %1455 = vmatpush.bf16.msra.mxu0 0
    %1456 = vmatpush.bf16.msra.mxu0 0
    %1457 = vmatpush.bf16.msra.mxu0 0
    %1458 = vmatpush.bf16.msra.mxu0 0
    %1459 = vmatpush.bf16.msra.mxu0 %v691
    %1460 = vmatmul.bf16.gmra.mxu0 %v792
    %v1461 = vpop.f32.mrf.mxu0
    %v1462 = vadd.f32 %v1413, %v1461
    %v1463 = vpop.f32.mrf.mxu0
    %v1464 = vadd.f32 %v1415, %v1463
    %1465 = vmatmul.bf16.gmra.mxu0 %v795
    %v1466 = vpop.f32.mrf.mxu0
    %v1467 = vadd.f32 %v1418, %v1466
    %v1468 = vpop.f32.mrf.mxu0
    %v1469 = vadd.f32 %v1420, %v1468
    %1470 = vmatmul.bf16.gmra.mxu0 %v798
    %v1471 = vpop.f32.mrf.mxu0
    %v1472 = vadd.f32 %v1423, %v1471
    %v1473 = vpop.f32.mrf.mxu0
    %v1474 = vadd.f32 %v1425, %v1473
    %1475 = vmatmul.bf16.gmra.mxu0 %v801
    %v1476 = vpop.f32.mrf.mxu0
    %v1477 = vadd.f32 %v1428, %v1476
    %v1478 = vpop.f32.mrf.mxu0
    %v1479 = vadd.f32 %v1430, %v1478
    %1480 = vmatmul.bf16.gmra.mxu0 %v804
    %v1481 = vpop.f32.mrf.mxu0
    %v1482 = vadd.f32 %v1433, %v1481
    %v1483 = vpop.f32.mrf.mxu0
    %v1484 = vadd.f32 %v1435, %v1483
    %1485 = vmatmul.bf16.gmra.mxu0 %v807
    %v1486 = vpop.f32.mrf.mxu0
    %v1487 = vadd.f32 %v1438, %v1486
    %v1488 = vpop.f32.mrf.mxu0
    %v1489 = vadd.f32 %v1440, %v1488
    %1490 = vmatmul.bf16.gmra.mxu0 %v810
    %v1491 = vpop.f32.mrf.mxu0
    %v1492 = vadd.f32 %v1443, %v1491
    %v1493 = vpop.f32.mrf.mxu0
    %v1494 = vadd.f32 %v1445, %v1493
    %1495 = vmatmul.bf16.gmra.mxu0 %v813
    %v1496 = vpop.f32.mrf.mxu0
    %v1497 = vadd.f32 %v1448, %v1496
    %v1498 = vpop.f32.mrf.mxu0
    %v1499 = vadd.f32 %v1450, %v1498
    %1500 = vdwg.mxu0
    %v1501 = vmax.f32 %v1119, 0.0
    %v1502 = vmax.f32 %v1462, 0.0
    %v1503 = vmax.f32 %v1121, 0.0
    %v1504 = vmax.f32 %v1464, 0.0
    %v1505 = vmax.f32 %v1124, 0.0
    %v1506 = vmax.f32 %v1467, 0.0
    %v1507 = vmax.f32 %v1126, 0.0
    %v1508 = vmax.f32 %v1469, 0.0
    %v1509 = vmax.f32 %v1129, 0.0
    %v1510 = vmax.f32 %v1472, 0.0
    %v1511 = vmax.f32 %v1131, 0.0
    %v1512 = vmax.f32 %v1474, 0.0
    %v1513 = vmax.f32 %v1134, 0.0
    %v1514 = vmax.f32 %v1477, 0.0
    %v1515 = vmax.f32 %v1136, 0.0
    %v1516 = vmax.f32 %v1479, 0.0
    %v1517 = vmax.f32 %v1139, 0.0
    %v1518 = vmax.f32 %v1482, 0.0
    %v1519 = vmax.f32 %v1141, 0.0
    %v1520 = vmax.f32 %v1484, 0.0
    %v1521 = vmax.f32 %v1144, 0.0
    %v1522 = vmax.f32 %v1487, 0.0
    %v1523 = vmax.f32 %v1146, 0.0
    %v1524 = vmax.f32 %v1489, 0.0
    %v1525 = vmax.f32 %v1149, 0.0
    %v1526 = vmax.f32 %v1492, 0.0
    %v1527 = vmax.f32 %v1151, 0.0
    %v1528 = vmax.f32 %v1494, 0.0
    %v1529 = vmax.f32 %v1154, 0.0
    %v1530 = vmax.f32 %v1497, 0.0
    %v1531 = vmax.f32 %v1156, 0.0
    %v1532 = vmax.f32 %v1499, 0.0
    %v1533 = vpack.c.bf16 %v1503, %v1501
    %v1534 = vpack.c.bf16 %v1504, %v1502
    %v1535 = vpack.c.bf16 %v1507, %v1505
    %v1536 = vpack.c.bf16 %v1508, %v1506
    %v1537 = vpack.c.bf16 %v1511, %v1509
    %v1538 = vpack.c.bf16 %v1512, %v1510
    %v1539 = vpack.c.bf16 %v1515, %v1513
    %v1540 = vpack.c.bf16 %v1516, %v1514
    %v1541 = vpack.c.bf16 %v1519, %v1517
    %v1542 = vpack.c.bf16 %v1520, %v1518
    %v1543 = vpack.c.bf16 %v1523, %v1521
    %v1544 = vpack.c.bf16 %v1524, %v1522
    %v1545 = vpack.c.bf16 %v1527, %v1525
    %v1546 = vpack.c.bf16 %v1528, %v1526
    %v1547 = vpack.c.bf16 %v1531, %v1529
    %v1548 = vpack.c.bf16 %v1532, %v1530
    %v1549 = vld [vmem:[%s3] sm:$0xff]
    %v1550 = vld [vmem:[%s3 + $0x8] sm:$0xff]
    %v1551 = vld [vmem:[%s3 + $0x10] sm:$0xff]
    %v1552 = vld [vmem:[%s3 + $0x18] sm:$0xff]
    %v1553 = vld [vmem:[%s3 + $0x20] sm:$0xff]
    %v1554 = vld [vmem:[%s3 + $0x28] sm:$0xff]
    %v1555 = vld [vmem:[%s3 + $0x30] sm:$0xff]
    %v1556 = vld [vmem:[%s3 + $0x38] sm:$0xff]
    %v1557 = vld [vmem:[%s3 + $0x40] sm:$0xff]
    %v1558 = vld [vmem:[%s3 + $0x48] sm:$0xff]
    %v1559 = vld [vmem:[%s3 + $0x50] sm:$0xff]
    %v1560 = vld [vmem:[%s3 + $0x58] sm:$0xff]
    %v1561 = vld [vmem:[%s3 + $0x60] sm:$0xff]
    %v1562 = vld [vmem:[%s3 + $0x68] sm:$0xff]
    %v1563 = vld [vmem:[%s3 + $0x70] sm:$0xff]
    %v1564 = vld [vmem:[%s3 + $0x78] sm:$0xff]
    %v1565 = vld [vmem:[%s3 + $0x80] sm:$0xff]
    %v1566 = vld [vmem:[%s3 + $0x88] sm:$0xff]
    %v1567 = vld [vmem:[%s3 + $0x90] sm:$0xff]
    %v1568 = vld [vmem:[%s3 + $0x98] sm:$0xff]
    %v1569 = vld [vmem:[%s3 + $0xa0] sm:$0xff]
    %v1570 = vld [vmem:[%s3 + $0xa8] sm:$0xff]
    %v1571 = vld [vmem:[%s3 + $0xb0] sm:$0xff]
    %v1572 = vld [vmem:[%s3 + $0xb8] sm:$0xff]
    %v1573 = vld [vmem:[%s3 + $0xc0] sm:$0xff]
    %v1574 = vld [vmem:[%s3 + $0xc8] sm:$0xff]
    %v1575 = vld [vmem:[%s3 + $0xd0] sm:$0xff]
    %v1576 = vld [vmem:[%s3 + $0xd8] sm:$0xff]
    %v1577 = vld [vmem:[%s3 + $0xe0] sm:$0xff]
    %v1578 = vld [vmem:[%s3 + $0xe8] sm:$0xff]
    %v1579 = vld [vmem:[%s3 + $0xf0] sm:$0xff]
    %v1580 = vld [vmem:[%s3 + $0xf8] sm:$0xff]
    %v1581 = vld [vmem:[%s4] sm:$0x3]
    %v1583 = vperm.slane %v1581, 0
    %v1584 = vperm.slane %v1581, 1
    %v1619 = vunpack.c.l.b16 %v1549
    %v1620 = vunpack.c.h.b16 %v1549
    %v1621 = vunpack.c.l.b16 %v1550
    %v1622 = vunpack.c.h.b16 %v1550
    %v1623 = vunpack.c.l.b16 %v1551
    %v1624 = vunpack.c.h.b16 %v1551
    %v1625 = vunpack.c.l.b16 %v1552
    %v1626 = vunpack.c.h.b16 %v1552
    %v1627 = vunpack.c.l.b16 %v1553
    %v1628 = vunpack.c.h.b16 %v1553
    %v1629 = vunpack.c.l.b16 %v1554
    %v1630 = vunpack.c.h.b16 %v1554
    %v1631 = vunpack.c.l.b16 %v1555
    %v1632 = vunpack.c.h.b16 %v1555
    %v1633 = vunpack.c.l.b16 %v1556
    %v1634 = vunpack.c.h.b16 %v1556
    %v1635 = vunpack.c.l.b16 %v1557
    %v1636 = vunpack.c.h.b16 %v1557
    %v1637 = vunpack.c.l.b16 %v1558
    %v1638 = vunpack.c.h.b16 %v1558
    %v1639 = vunpack.c.l.b16 %v1559
    %v1640 = vunpack.c.h.b16 %v1559
    %v1641 = vunpack.c.l.b16 %v1560
    %v1642 = vunpack.c.h.b16 %v1560
    %v1643 = vunpack.c.l.b16 %v1561
    %v1644 = vunpack.c.h.b16 %v1561
    %v1645 = vunpack.c.l.b16 %v1562
    %v1646 = vunpack.c.h.b16 %v1562
    %v1647 = vunpack.c.l.b16 %v1563
    %v1648 = vunpack.c.h.b16 %v1563
    %v1649 = vunpack.c.l.b16 %v1564
    %v1650 = vunpack.c.h.b16 %v1564
    %v1651 = vunpack.c.l.b16 %v1565
    %v1652 = vunpack.c.h.b16 %v1565
    %v1653 = vunpack.c.l.b16 %v1566
    %v1654 = vunpack.c.h.b16 %v1566
    %v1655 = vunpack.c.l.b16 %v1567
    %v1656 = vunpack.c.h.b16 %v1567
    %v1657 = vunpack.c.l.b16 %v1568
    %v1658 = vunpack.c.h.b16 %v1568
    %v1659 = vunpack.c.l.b16 %v1569
    %v1660 = vunpack.c.h.b16 %v1569
    %v1661 = vunpack.c.l.b16 %v1570
    %v1662 = vunpack.c.h.b16 %v1570
    %v1663 = vunpack.c.l.b16 %v1571
    %v1664 = vunpack.c.h.b16 %v1571
    %v1665 = vunpack.c.l.b16 %v1572
    %v1666 = vunpack.c.h.b16 %v1572
    %v1667 = vunpack.c.l.b16 %v1573
    %v1668 = vunpack.c.h.b16 %v1573
    %v1669 = vunpack.c.l.b16 %v1574
    %v1670 = vunpack.c.h.b16 %v1574
    %v1671 = vunpack.c.l.b16 %v1575
    %v1672 = vunpack.c.h.b16 %v1575
    %v1673 = vunpack.c.l.b16 %v1576
    %v1674 = vunpack.c.h.b16 %v1576
    %v1675 = vunpack.c.l.b16 %v1577
    %v1676 = vunpack.c.h.b16 %v1577
    %v1677 = vunpack.c.l.b16 %v1578
    %v1678 = vunpack.c.h.b16 %v1578
    %v1679 = vunpack.c.l.b16 %v1579
    %v1680 = vunpack.c.h.b16 %v1579
    %v1681 = vunpack.c.l.b16 %v1580
    %v1682 = vunpack.c.h.b16 %v1580
    %v1683 = vpack.c.b16 %v1621, %v1619
    %v1684 = vpack.c.b16 %v1622, %v1620
    %v1685 = vpack.c.b16 %v1625, %v1623
    %v1686 = vpack.c.b16 %v1626, %v1624
    %v1687 = vpack.c.b16 %v1629, %v1627
    %v1688 = vpack.c.b16 %v1630, %v1628
    %v1689 = vpack.c.b16 %v1633, %v1631
    %v1690 = vpack.c.b16 %v1634, %v1632
    %v1691 = vpack.c.b16 %v1637, %v1635
    %v1692 = vpack.c.b16 %v1638, %v1636
    %v1693 = vpack.c.b16 %v1641, %v1639
    %v1694 = vpack.c.b16 %v1642, %v1640
    %v1695 = vpack.c.b16 %v1645, %v1643
    %v1696 = vpack.c.b16 %v1646, %v1644
    %v1697 = vpack.c.b16 %v1649, %v1647
    %v1698 = vpack.c.b16 %v1650, %v1648
    %v1699 = vpack.c.b16 %v1653, %v1651
    %v1700 = vpack.c.b16 %v1654, %v1652
    %v1701 = vpack.c.b16 %v1657, %v1655
    %v1702 = vpack.c.b16 %v1658, %v1656
    %v1703 = vpack.c.b16 %v1661, %v1659
    %v1704 = vpack.c.b16 %v1662, %v1660
    %v1705 = vpack.c.b16 %v1665, %v1663
    %v1706 = vpack.c.b16 %v1666, %v1664
    %v1707 = vpack.c.b16 %v1669, %v1667
    %v1708 = vpack.c.b16 %v1670, %v1668
    %v1709 = vpack.c.b16 %v1673, %v1671
    %v1710 = vpack.c.b16 %v1674, %v1672
    %v1711 = vpack.c.b16 %v1677, %v1675
    %v1712 = vpack.c.b16 %v1678, %v1676
    %v1713 = vpack.c.b16 %v1681, %v1679
    %v1714 = vpack.c.b16 %v1682, %v1680
    %1747 = vmatpush.bf16.msra.mxu0 %v1697
    %1748 = vmatpush.bf16.msra.mxu0 %v1695
    %1749 = vmatpush.bf16.msra.mxu0 %v1693
    %1750 = vmatpush.bf16.msra.mxu0 %v1691
    %1751 = vmatpush.bf16.msra.mxu0 %v1689
    %1752 = vmatpush.bf16.msra.mxu0 %v1687
    %1753 = vmatpush.bf16.msra.mxu0 %v1685
    %1754 = vmatpush.bf16.msra.mxu0 %v1683
    %1755 = vmatmul.bf16.gmra.mxu0 %v1533
    %v1756 = vpop.f32.mrf.mxu0
    %v1757 = vadd.f32 %v1583, %v1756
    %v1758 = vpop.f32.mrf.mxu0
    %v1759 = vadd.f32 %v1583, %v1758
    %1760 = vmatmul.bf16.gmra.mxu0 %v1535
    %v1761 = vpop.f32.mrf.mxu0
    %v1762 = vadd.f32 %v1583, %v1761
    %v1763 = vpop.f32.mrf.mxu0
    %v1764 = vadd.f32 %v1583, %v1763
    %1765 = vmatmul.bf16.gmra.mxu0 %v1537
    %v1766 = vpop.f32.mrf.mxu0
    %v1767 = vadd.f32 %v1583, %v1766
    %v1768 = vpop.f32.mrf.mxu0
    %v1769 = vadd.f32 %v1583, %v1768
    %1770 = vmatmul.bf16.gmra.mxu0 %v1539
    %v1771 = vpop.f32.mrf.mxu0
    %v1772 = vadd.f32 %v1583, %v1771
    %v1773 = vpop.f32.mrf.mxu0
    %v1774 = vadd.f32 %v1583, %v1773
    %1775 = vmatmul.bf16.gmra.mxu0 %v1541
    %v1776 = vpop.f32.mrf.mxu0
    %v1777 = vadd.f32 %v1583, %v1776
    %v1778 = vpop.f32.mrf.mxu0
    %v1779 = vadd.f32 %v1583, %v1778
    %1780 = vmatmul.bf16.gmra.mxu0 %v1543
    %v1781 = vpop.f32.mrf.mxu0
    %v1782 = vadd.f32 %v1583, %v1781
    %v1783 = vpop.f32.mrf.mxu0
    %v1784 = vadd.f32 %v1583, %v1783
    %1785 = vmatmul.bf16.gmra.mxu0 %v1545
    %v1786 = vpop.f32.mrf.mxu0
    %v1787 = vadd.f32 %v1583, %v1786
    %v1788 = vpop.f32.mrf.mxu0
    %v1789 = vadd.f32 %v1583, %v1788
    %1790 = vmatmul.bf16.gmra.mxu0 %v1547
    %v1791 = vpop.f32.mrf.mxu0
    %v1792 = vadd.f32 %v1583, %v1791
    %v1793 = vpop.f32.mrf.mxu0
    %v1794 = vadd.f32 %v1583, %v1793
    %1795 = vdwg.mxu0
    %1796 = vmatpush.bf16.msra.mxu0 %v1713
    %1797 = vmatpush.bf16.msra.mxu0 %v1711
    %1798 = vmatpush.bf16.msra.mxu0 %v1709
    %1799 = vmatpush.bf16.msra.mxu0 %v1707
    %1800 = vmatpush.bf16.msra.mxu0 %v1705
    %1801 = vmatpush.bf16.msra.mxu0 %v1703
    %1802 = vmatpush.bf16.msra.mxu0 %v1701
    %1803 = vmatpush.bf16.msra.mxu0 %v1699
    %1804 = vmatmul.bf16.gmra.mxu0 %v1534
    %v1805 = vpop.f32.mrf.mxu0
    %v1806 = vadd.f32 %v1757, %v1805
    %v1807 = vpop.f32.mrf.mxu0
    %v1808 = vadd.f32 %v1759, %v1807
    %1809 = vmatmul.bf16.gmra.mxu0 %v1536
    %v1810 = vpop.f32.mrf.mxu0
    %v1811 = vadd.f32 %v1762, %v1810
    %v1812 = vpop.f32.mrf.mxu0
    %v1813 = vadd.f32 %v1764, %v1812
    %1814 = vmatmul.bf16.gmra.mxu0 %v1538
    %v1815 = vpop.f32.mrf.mxu0
    %v1816 = vadd.f32 %v1767, %v1815
    %v1817 = vpop.f32.mrf.mxu0
    %v1818 = vadd.f32 %v1769, %v1817
    %1819 = vmatmul.bf16.gmra.mxu0 %v1540
    %v1820 = vpop.f32.mrf.mxu0
    %v1821 = vadd.f32 %v1772, %v1820
    %v1822 = vpop.f32.mrf.mxu0
    %v1823 = vadd.f32 %v1774, %v1822
    %1824 = vmatmul.bf16.gmra.mxu0 %v1542
    %v1825 = vpop.f32.mrf.mxu0
    %v1826 = vadd.f32 %v1777, %v1825
    %v1827 = vpop.f32.mrf.mxu0
    %v1828 = vadd.f32 %v1779, %v1827
    %1829 = vmatmul.bf16.gmra.mxu0 %v1544
    %v1830 = vpop.f32.mrf.mxu0
    %v1831 = vadd.f32 %v1782, %v1830
    %v1832 = vpop.f32.mrf.mxu0
    %v1833 = vadd.f32 %v1784, %v1832
    %1834 = vmatmul.bf16.gmra.mxu0 %v1546
    %v1835 = vpop.f32.mrf.mxu0
    %v1836 = vadd.f32 %v1787, %v1835
    %v1837 = vpop.f32.mrf.mxu0
    %v1838 = vadd.f32 %v1789, %v1837
    %1839 = vmatmul.bf16.gmra.mxu0 %v1548
    %v1840 = vpop.f32.mrf.mxu0
    %v1841 = vadd.f32 %v1792, %v1840
    %v1842 = vpop.f32.mrf.mxu0
    %v1843 = vadd.f32 %v1794, %v1842
    %1844 = vdwg.mxu0
    %1845 = vmatpush.bf16.msra.mxu0 %v1698
    %1846 = vmatpush.bf16.msra.mxu0 %v1696
    %1847 = vmatpush.bf16.msra.mxu0 %v1694
    %1848 = vmatpush.bf16.msra.mxu0 %v1692
    %1849 = vmatpush.bf16.msra.mxu0 %v1690
    %1850 = vmatpush.bf16.msra.mxu0 %v1688
    %1851 = vmatpush.bf16.msra.mxu0 %v1686
    %1852 = vmatpush.bf16.msra.mxu0 %v1684
    %1853 = vmatmul.bf16.gmra.mxu0 %v1533
    %v1854 = vpop.f32.mrf.mxu0
    %v1855 = vadd.f32 %v1584, %v1854
    %v1856 = vpop.f32.mrf.mxu0
    %v1857 = vadd.f32 %v1584, %v1856
    %1858 = vmatmul.bf16.gmra.mxu0 %v1535
    %v1859 = vpop.f32.mrf.mxu0
    %v1860 = vadd.f32 %v1584, %v1859
    %v1861 = vpop.f32.mrf.mxu0
    %v1862 = vadd.f32 %v1584, %v1861
    %1863 = vmatmul.bf16.gmra.mxu0 %v1537
    %v1864 = vpop.f32.mrf.mxu0
    %v1865 = vadd.f32 %v1584, %v1864
    %v1866 = vpop.f32.mrf.mxu0
    %v1867 = vadd.f32 %v1584, %v1866
    %1868 = vmatmul.bf16.gmra.mxu0 %v1539
    %v1869 = vpop.f32.mrf.mxu0
    %v1870 = vadd.f32 %v1584, %v1869
    %v1871 = vpop.f32.mrf.mxu0
    %v1872 = vadd.f32 %v1584, %v1871
    %1873 = vmatmul.bf16.gmra.mxu0 %v1541
    %v1874 = vpop.f32.mrf.mxu0
    %v1875 = vadd.f32 %v1584, %v1874
    %v1876 = vpop.f32.mrf.mxu0
    %v1877 = vadd.f32 %v1584, %v1876
    %1878 = vmatmul.bf16.gmra.mxu0 %v1543
    %v1879 = vpop.f32.mrf.mxu0
    %v1880 = vadd.f32 %v1584, %v1879
    %v1881 = vpop.f32.mrf.mxu0
    %v1882 = vadd.f32 %v1584, %v1881
    %1883 = vmatmul.bf16.gmra.mxu0 %v1545
    %v1884 = vpop.f32.mrf.mxu0
    %v1885 = vadd.f32 %v1584, %v1884
    %v1886 = vpop.f32.mrf.mxu0
    %v1887 = vadd.f32 %v1584, %v1886
    %1888 = vmatmul.bf16.gmra.mxu0 %v1547
    %v1889 = vpop.f32.mrf.mxu0
    %v1890 = vadd.f32 %v1584, %v1889
    %v1891 = vpop.f32.mrf.mxu0
    %v1892 = vadd.f32 %v1584, %v1891
    %1893 = vdwg.mxu0
    %1894 = vmatpush.bf16.msra.mxu0 %v1714
    %1895 = vmatpush.bf16.msra.mxu0 %v1712
    %1896 = vmatpush.bf16.msra.mxu0 %v1710
    %1897 = vmatpush.bf16.msra.mxu0 %v1708
    %1898 = vmatpush.bf16.msra.mxu0 %v1706
    %1899 = vmatpush.bf16.msra.mxu0 %v1704
    %1900 = vmatpush.bf16.msra.mxu0 %v1702
    %1901 = vmatpush.bf16.msra.mxu0 %v1700
    %1902 = vmatmul.bf16.gmra.mxu0 %v1534
    %v1903 = vpop.f32.mrf.mxu0
    %v1904 = vadd.f32 %v1855, %v1903
    %v1905 = vpop.f32.mrf.mxu0
    %v1906 = vadd.f32 %v1857, %v1905
    %1907 = vmatmul.bf16.gmra.mxu0 %v1536
    %v1908 = vpop.f32.mrf.mxu0
    %v1909 = vadd.f32 %v1860, %v1908
    %v1910 = vpop.f32.mrf.mxu0
    %v1911 = vadd.f32 %v1862, %v1910
    %1912 = vmatmul.bf16.gmra.mxu0 %v1538
    %v1913 = vpop.f32.mrf.mxu0
    %v1914 = vadd.f32 %v1865, %v1913
    %v1915 = vpop.f32.mrf.mxu0
    %v1916 = vadd.f32 %v1867, %v1915
    %1917 = vmatmul.bf16.gmra.mxu0 %v1540
    %v1918 = vpop.f32.mrf.mxu0
    %v1919 = vadd.f32 %v1870, %v1918
    %v1920 = vpop.f32.mrf.mxu0
    %v1921 = vadd.f32 %v1872, %v1920
    %1922 = vmatmul.bf16.gmra.mxu0 %v1542
    %v1923 = vpop.f32.mrf.mxu0
    %v1924 = vadd.f32 %v1875, %v1923
    %v1925 = vpop.f32.mrf.mxu0
    %v1926 = vadd.f32 %v1877, %v1925
    %1927 = vmatmul.bf16.gmra.mxu0 %v1544
    %v1928 = vpop.f32.mrf.mxu0
    %v1929 = vadd.f32 %v1880, %v1928
    %v1930 = vpop.f32.mrf.mxu0
    %v1931 = vadd.f32 %v1882, %v1930
    %1932 = vmatmul.bf16.gmra.mxu0 %v1546
    %v1933 = vpop.f32.mrf.mxu0
    %v1934 = vadd.f32 %v1885, %v1933
    %v1935 = vpop.f32.mrf.mxu0
    %v1936 = vadd.f32 %v1887, %v1935
    %1937 = vmatmul.bf16.gmra.mxu0 %v1548
    %v1938 = vpop.f32.mrf.mxu0
    %v1939 = vadd.f32 %v1890, %v1938
    %v1940 = vpop.f32.mrf.mxu0
    %v1941 = vadd.f32 %v1892, %v1940
    %1942 = vdwg.mxu0
    %v1943 = vmax.f32 %v1806, 0.0
    %v1944 = vmax.f32 %v1904, 0.0
    %v1945 = vmax.f32 %v1808, 0.0
    %v1946 = vmax.f32 %v1906, 0.0
    %v1947 = vmax.f32 %v1811, 0.0
    %v1948 = vmax.f32 %v1909, 0.0
    %v1949 = vmax.f32 %v1813, 0.0
    %v1950 = vmax.f32 %v1911, 0.0
    %v1951 = vmax.f32 %v1816, 0.0
    %v1952 = vmax.f32 %v1914, 0.0
    %v1953 = vmax.f32 %v1818, 0.0
    %v1954 = vmax.f32 %v1916, 0.0
    %v1955 = vmax.f32 %v1821, 0.0
    %v1956 = vmax.f32 %v1919, 0.0
    %v1957 = vmax.f32 %v1823, 0.0
    %v1958 = vmax.f32 %v1921, 0.0
    %v1959 = vmax.f32 %v1826, 0.0
    %v1960 = vmax.f32 %v1924, 0.0
    %v1961 = vmax.f32 %v1828, 0.0
    %v1962 = vmax.f32 %v1926, 0.0
    %v1963 = vmax.f32 %v1831, 0.0
    %v1964 = vmax.f32 %v1929, 0.0
    %v1965 = vmax.f32 %v1833, 0.0
    %v1966 = vmax.f32 %v1931, 0.0
    %v1967 = vmax.f32 %v1836, 0.0
    %v1968 = vmax.f32 %v1934, 0.0
    %v1969 = vmax.f32 %v1838, 0.0
    %v1970 = vmax.f32 %v1936, 0.0
    %v1971 = vmax.f32 %v1841, 0.0
    %v1972 = vmax.f32 %v1939, 0.0
    %v1973 = vmax.f32 %v1843, 0.0
    %v1974 = vmax.f32 %v1941, 0.0
    %v1975 = vpack.c.bf16 %v1945, %v1943
    %v1976 = vpack.c.bf16 %v1946, %v1944
    %v1977 = vpack.c.bf16 %v1949, %v1947
    %v1978 = vpack.c.bf16 %v1950, %v1948
    %v1979 = vpack.c.bf16 %v1953, %v1951
    %v1980 = vpack.c.bf16 %v1954, %v1952
    %v1981 = vpack.c.bf16 %v1957, %v1955
    %v1982 = vpack.c.bf16 %v1958, %v1956
    %v1983 = vpack.c.bf16 %v1961, %v1959
    %v1984 = vpack.c.bf16 %v1962, %v1960
    %v1985 = vpack.c.bf16 %v1965, %v1963
    %v1986 = vpack.c.bf16 %v1966, %v1964
    %v1987 = vpack.c.bf16 %v1969, %v1967
    %v1988 = vpack.c.bf16 %v1970, %v1968
    %v1989 = vpack.c.bf16 %v1973, %v1971
    %v1990 = vpack.c.bf16 %v1974, %v1972
    %v1991 = vld [vmem:[%s5] sm:$0xf]
    %v1992 = vld [vmem:[%s5 + $0x4] sm:$0xf]
    %v1993 = vld [vmem:[%s5 + $0x8] sm:$0xf]
    %v1994 = vld [vmem:[%s5 + $0xc] sm:$0xf]
    %v1995 = vld [vmem:[%s5 + $0x10] sm:$0xf]
    %v1996 = vld [vmem:[%s5 + $0x14] sm:$0xf]
    %v1997 = vld [vmem:[%s5 + $0x18] sm:$0xf]
    %v1998 = vld [vmem:[%s5 + $0x1c] sm:$0xf]
    %v1999 = vld [vmem:[%s5 + $0x20] sm:$0xf]
    %v2000 = vld [vmem:[%s5 + $0x24] sm:$0xf]
    %v2001 = vld [vmem:[%s5 + $0x28] sm:$0xf]
    %v2002 = vld [vmem:[%s5 + $0x2c] sm:$0xf]
    %v2003 = vld [vmem:[%s5 + $0x30] sm:$0xf]
    %v2004 = vld [vmem:[%s5 + $0x34] sm:$0xf]
    %v2005 = vld [vmem:[%s5 + $0x38] sm:$0xf]
    %v2006 = vld [vmem:[%s5 + $0x3c] sm:$0xf]
    %v2007 = vld [vmem:[%s5 + $0x40] sm:$0xf]
    %v2008 = vld [vmem:[%s5 + $0x44] sm:$0xf]
    %v2009 = vld [vmem:[%s5 + $0x48] sm:$0xf]
    %v2010 = vld [vmem:[%s5 + $0x4c] sm:$0xf]
    %v2011 = vld [vmem:[%s5 + $0x50] sm:$0xf]
    %v2012 = vld [vmem:[%s5 + $0x54] sm:$0xf]
    %v2013 = vld [vmem:[%s5 + $0x58] sm:$0xf]
    %v2014 = vld [vmem:[%s5 + $0x5c] sm:$0xf]
    %v2015 = vld [vmem:[%s5 + $0x60] sm:$0xf]
    %v2016 = vld [vmem:[%s5 + $0x64] sm:$0xf]
    %v2017 = vld [vmem:[%s5 + $0x68] sm:$0xf]
    %v2018 = vld [vmem:[%s5 + $0x6c] sm:$0xf]
    %v2019 = vld [vmem:[%s5 + $0x70] sm:$0xf]
    %v2020 = vld [vmem:[%s5 + $0x74] sm:$0xf]
    %v2021 = vld [vmem:[%s5 + $0x78] sm:$0xf]
    %v2022 = vld [vmem:[%s5 + $0x7c] sm:$0xf]
    %v2023 = vld [vmem:[%s6] sm:$0x1]
    %v2025 = vperm.slane %v2023, 0
    %v2059 = vunpack.c.l.b16 %v1991
    %v2060 = vunpack.c.l.b16 %v1992
    %v2061 = vunpack.c.l.b16 %v1993
    %v2062 = vunpack.c.l.b16 %v1994
    %v2063 = vunpack.c.l.b16 %v1995
    %v2064 = vunpack.c.l.b16 %v1996
    %v2065 = vunpack.c.l.b16 %v1997
    %v2066 = vunpack.c.l.b16 %v1998
    %v2067 = vunpack.c.l.b16 %v1999
    %v2068 = vunpack.c.l.b16 %v2000
    %v2069 = vunpack.c.l.b16 %v2001
    %v2070 = vunpack.c.l.b16 %v2002
    %v2071 = vunpack.c.l.b16 %v2003
    %v2072 = vunpack.c.l.b16 %v2004
    %v2073 = vunpack.c.l.b16 %v2005
    %v2074 = vunpack.c.l.b16 %v2006
    %v2075 = vunpack.c.l.b16 %v2007
    %v2076 = vunpack.c.l.b16 %v2008
    %v2077 = vunpack.c.l.b16 %v2009
    %v2078 = vunpack.c.l.b16 %v2010
    %v2079 = vunpack.c.l.b16 %v2011
    %v2080 = vunpack.c.l.b16 %v2012
    %v2081 = vunpack.c.l.b16 %v2013
    %v2082 = vunpack.c.l.b16 %v2014
    %v2083 = vunpack.c.l.b16 %v2015
    %v2084 = vunpack.c.l.b16 %v2016
    %v2085 = vunpack.c.l.b16 %v2017
    %v2086 = vunpack.c.l.b16 %v2018
    %v2087 = vunpack.c.l.b16 %v2019
    %v2088 = vunpack.c.l.b16 %v2020
    %v2089 = vunpack.c.l.b16 %v2021
    %v2090 = vunpack.c.l.b16 %v2022
    %v2091 = vpack.c.b16 %v2060, %v2059
    %v2092 = vpack.c.b16 %v2062, %v2061
    %v2093 = vpack.c.b16 %v2064, %v2063
    %v2094 = vpack.c.b16 %v2066, %v2065
    %v2095 = vpack.c.b16 %v2068, %v2067
    %v2096 = vpack.c.b16 %v2070, %v2069
    %v2097 = vpack.c.b16 %v2072, %v2071
    %v2098 = vpack.c.b16 %v2074, %v2073
    %v2099 = vpack.c.b16 %v2076, %v2075
    %v2100 = vpack.c.b16 %v2078, %v2077
    %v2101 = vpack.c.b16 %v2080, %v2079
    %v2102 = vpack.c.b16 %v2082, %v2081
    %v2103 = vpack.c.b16 %v2084, %v2083
    %v2104 = vpack.c.b16 %v2086, %v2085
    %v2105 = vpack.c.b16 %v2088, %v2087
    %v2106 = vpack.c.b16 %v2090, %v2089
    %2123 = vmatpush.bf16.msra.mxu0 %v2098
    %2124 = vmatpush.bf16.msra.mxu0 %v2097
    %2125 = vmatpush.bf16.msra.mxu0 %v2096
    %2126 = vmatpush.bf16.msra.mxu0 %v2095
    %2127 = vmatpush.bf16.msra.mxu0 %v2094
    %2128 = vmatpush.bf16.msra.mxu0 %v2093
    %2129 = vmatpush.bf16.msra.mxu0 %v2092
    %2130 = vmatpush.bf16.msra.mxu0 %v2091
    %2131 = vmatmul.bf16.gmra.mxu0 %v1975
    %v2132 = vpop.f32.mrf.mxu0
    %v2133 = vadd.f32 %v2025, %v2132
    %v2134 = vpop.f32.mrf.mxu0
    %v2135 = vadd.f32 %v2025, %v2134
    %2136 = vmatmul.bf16.gmra.mxu0 %v1977
    %v2137 = vpop.f32.mrf.mxu0
    %v2138 = vadd.f32 %v2025, %v2137
    %v2139 = vpop.f32.mrf.mxu0
    %v2140 = vadd.f32 %v2025, %v2139
    %2141 = vmatmul.bf16.gmra.mxu0 %v1979
    %v2142 = vpop.f32.mrf.mxu0
    %v2143 = vadd.f32 %v2025, %v2142
    %v2144 = vpop.f32.mrf.mxu0
    %v2145 = vadd.f32 %v2025, %v2144
    %2146 = vmatmul.bf16.gmra.mxu0 %v1981
    %v2147 = vpop.f32.mrf.mxu0
    %v2148 = vadd.f32 %v2025, %v2147
    %v2149 = vpop.f32.mrf.mxu0
    %v2150 = vadd.f32 %v2025, %v2149
    %2151 = vmatmul.bf16.gmra.mxu0 %v1983
    %v2152 = vpop.f32.mrf.mxu0
    %v2153 = vadd.f32 %v2025, %v2152
    %v2154 = vpop.f32.mrf.mxu0
    %v2155 = vadd.f32 %v2025, %v2154
    %2156 = vmatmul.bf16.gmra.mxu0 %v1985
    %v2157 = vpop.f32.mrf.mxu0
    %v2158 = vadd.f32 %v2025, %v2157
    %v2159 = vpop.f32.mrf.mxu0
    %v2160 = vadd.f32 %v2025, %v2159
    %2161 = vmatmul.bf16.gmra.mxu0 %v1987
    %v2162 = vpop.f32.mrf.mxu0
    %v2163 = vadd.f32 %v2025, %v2162
    %v2164 = vpop.f32.mrf.mxu0
    %v2165 = vadd.f32 %v2025, %v2164
    %2166 = vmatmul.bf16.gmra.mxu0 %v1989
    %v2167 = vpop.f32.mrf.mxu0
    %v2168 = vadd.f32 %v2025, %v2167
    %v2169 = vpop.f32.mrf.mxu0
    %v2170 = vadd.f32 %v2025, %v2169
    %2171 = vdwg.mxu0
    %2172 = vmatpush.bf16.msra.mxu0 %v2106
    %2173 = vmatpush.bf16.msra.mxu0 %v2105
    %2174 = vmatpush.bf16.msra.mxu0 %v2104
    %2175 = vmatpush.bf16.msra.mxu0 %v2103
    %2176 = vmatpush.bf16.msra.mxu0 %v2102
    %2177 = vmatpush.bf16.msra.mxu0 %v2101
    %2178 = vmatpush.bf16.msra.mxu0 %v2100
    %2179 = vmatpush.bf16.msra.mxu0 %v2099
    %2180 = vmatmul.bf16.gmra.mxu0 %v1976
    %v2181 = vpop.f32.mrf.mxu0
    %v2182 = vadd.f32 %v2133, %v2181
    %v2183 = vpop.f32.mrf.mxu0
    %v2184 = vadd.f32 %v2135, %v2183
    %2185 = vmatmul.bf16.gmra.mxu0 %v1978
    %v2186 = vpop.f32.mrf.mxu0
    %v2187 = vadd.f32 %v2138, %v2186
    %v2188 = vpop.f32.mrf.mxu0
    %v2189 = vadd.f32 %v2140, %v2188
    %2190 = vmatmul.bf16.gmra.mxu0 %v1980
    %v2191 = vpop.f32.mrf.mxu0
    %v2192 = vadd.f32 %v2143, %v2191
    %v2193 = vpop.f32.mrf.mxu0
    %v2194 = vadd.f32 %v2145, %v2193
    %2195 = vmatmul.bf16.gmra.mxu0 %v1982
    %v2196 = vpop.f32.mrf.mxu0
    %v2197 = vadd.f32 %v2148, %v2196
    %v2198 = vpop.f32.mrf.mxu0
    %v2199 = vadd.f32 %v2150, %v2198
    %2200 = vmatmul.bf16.gmra.mxu0 %v1984
    %v2201 = vpop.f32.mrf.mxu0
    %v2202 = vadd.f32 %v2153, %v2201
    %v2203 = vpop.f32.mrf.mxu0
    %v2204 = vadd.f32 %v2155, %v2203
    %2205 = vmatmul.bf16.gmra.mxu0 %v1986
    %v2206 = vpop.f32.mrf.mxu0
    %v2207 = vadd.f32 %v2158, %v2206
    %v2208 = vpop.f32.mrf.mxu0
    %v2209 = vadd.f32 %v2160, %v2208
    %2210 = vmatmul.bf16.gmra.mxu0 %v1988
    %v2211 = vpop.f32.mrf.mxu0
    %v2212 = vadd.f32 %v2163, %v2211
    %v2213 = vpop.f32.mrf.mxu0
    %v2214 = vadd.f32 %v2165, %v2213
    %2215 = vmatmul.bf16.gmra.mxu0 %v1990
    %v2216 = vpop.f32.mrf.mxu0
    %v2217 = vadd.f32 %v2168, %v2216
    %v2218 = vpop.f32.mrf.mxu0
    %v2219 = vadd.f32 %v2170, %v2218
    %2220 = vdwg.mxu0
    %2221 = vst [vmem:[#allocation2] sm:$0xff] %v2182
    %2222 = vst [vmem:[#allocation2 + $0x8] sm:$0xff] %v2184
    %2223 = vst [vmem:[#allocation2 + $0x10] sm:$0xff] %v2187
    %2224 = vst [vmem:[#allocation2 + $0x18] sm:$0xff] %v2189
    %2225 = vst [vmem:[#allocation2 + $0x20] sm:$0xff] %v2192
    %2226 = vst [vmem:[#allocation2 + $0x28] sm:$0xff] %v2194
    %2227 = vst [vmem:[#allocation2 + $0x30] sm:$0xff] %v2197
    %2228 = vst [vmem:[#allocation2 + $0x38] sm:$0xff] %v2199
    %2229 = vst [vmem:[#allocation2 + $0x40] sm:$0xff] %v2202
    %2230 = vst [vmem:[#allocation2 + $0x48] sm:$0xff] %v2204
    %2231 = vst [vmem:[#allocation2 + $0x50] sm:$0xff] %v2207
    %2232 = vst [vmem:[#allocation2 + $0x58] sm:$0xff] %v2209
    %2233 = vst [vmem:[#allocation2 + $0x60] sm:$0xff] %v2212
    %2234 = vst [vmem:[#allocation2 + $0x68] sm:$0xff] %v2214
    %2235 = vst [vmem:[#allocation2 + $0x70] sm:$0xff] %v2217
    %2236 = vst [vmem:[#allocation2 + $0x78] sm:$0xff] %v2219
    // Predicated region
    $region30: #{tpu_custom_call.1} parent=1 // pred_check
      _
    $region31: #{tpu_custom_call.1} parent=1 // pred_check_branch
      %2238 = sbr.rel (0) target = $region33
    $region32: #{tpu_custom_call.1} parent=1 // pred_region
      %2240 = vsyncadd [#allocation3], 0
      %s2241 = sshll.u32 [#allocation2], 4
      %s2242 = int_to_ptr.vmem [resolvable:$true] %s2241
      %s2243 = sshll.u32 %s7, 4
      %s2244 = int_to_ptr.hbm [resolvable:$true] %s2243
      %2249 = dma.vmem_to_hbm [thread:$0]  %s2242, 2048, %s2244, [#allocation3], 128, 128, 8
    $region33: #{tpu_custom_call.1} parent=1 // pred_fallthru
      _
    // Predicated region
    $region34: #{tpu_custom_call.1} parent=1 // pred_check
      _
    $region35: #{tpu_custom_call.1} parent=1 // pred_check_branch
      %2251 = sbr.rel (0) target = $region37
    $region36: #{tpu_custom_call.1} parent=1 // pred_region
      %2253 = dma.done [#allocation3], 2048
    $region37: #{tpu_custom_call.1} parent=1 // pred_fallthru
      _
    %2254 = vsyncpa [#allocation3], 1

</llo_original>
